<compile_context>
chip_gen: v6e
topology: v6e:2x2x1
jax: 0.10.0
libtpu: 0.0.40
codegen_flags: <defaults>
</compile_context>

<pallas_src>
import functools

import jax
import jax.numpy as jnp
from jax import lax
from jax.experimental import pallas as pl
from jax.experimental.pallas import tpu as pltpu


# ---------------------------------------------------------------------------
# Stage 1: fused Q/K/V projection (Q is pre-scaled by 1/sqrt(dout)).
# ---------------------------------------------------------------------------
def _project_kernel(x_ref, wq_ref, wk_ref, wv_ref, q_ref, k_ref, v_ref, *, scale):
    x = x_ref[...]                                           # (tr, din) bf16
    q = jnp.dot(x, wq_ref[...], preferred_element_type=jnp.float32) * scale
    k = jnp.dot(x, wk_ref[...], preferred_element_type=jnp.float32)
    v = jnp.dot(x, wv_ref[...], preferred_element_type=jnp.float32)
    q_ref[...] = q.astype(q_ref.dtype)
    k_ref[...] = k.astype(k_ref.dtype)
    v_ref[...] = v.astype(v_ref.dtype)


def _project(x, wq, wk, wv, *, scale, block_rows, stream_dtype):
    n, din = x.shape
    dout = wq.shape[1]
    tr = min(block_rows, n)
    assert n % tr == 0, "sequence length must divide the projection row tile"

    stream_bytes = jnp.dtype(stream_dtype).itemsize
    cost = pl.CostEstimate(
        flops=2 * n * din * dout * 3,
        transcendentals=0,
        bytes_accessed=(n * din * x.dtype.itemsize
                        + 3 * din * dout * wq.dtype.itemsize
                        + 3 * n * dout * stream_bytes),
    )

    grid_spec = pltpu.PrefetchScalarGridSpec(
        num_scalar_prefetch=0,
        grid=(n // tr,),
        in_specs=[
            pl.BlockSpec((tr, din), lambda r: (r, 0)),
            # Weights stay resident (constant block index).  For very large
            # din/dout consider pipeline_mode=pl.Buffered(1) to single-buffer.
            pl.BlockSpec((din, dout), lambda r: (0, 0)),
            pl.BlockSpec((din, dout), lambda r: (0, 0)),
            pl.BlockSpec((din, dout), lambda r: (0, 0)),
        ],
        out_specs=[
            pl.BlockSpec((tr, dout), lambda r: (r, 0)),
            pl.BlockSpec((tr, dout), lambda r: (r, 0)),
            pl.BlockSpec((tr, dout), lambda r: (r, 0)),
        ],
    )

    return pl.pallas_call(
        functools.partial(_project_kernel, scale=scale),
        out_shape=tuple(jax.ShapeDtypeStruct((n, dout), stream_dtype)
                        for _ in range(3)),
        grid_spec=grid_spec,
        compiler_params=pltpu.CompilerParams(dimension_semantics=("parallel",)),
        cost_estimate=cost,
    )(x, wq, wk, wv)


# ---------------------------------------------------------------------------
# Stage 2a: small-N attention — whole KV range resident, one-shot softmax.
# ---------------------------------------------------------------------------
def _attn_single_kv_kernel(q_ref, k_ref, v_ref, o_ref):
    # scores = Q @ K^T (Q already carries the 1/sqrt(dout) scale).
    s = lax.dot_general(q_ref[...], k_ref[...],
                        dimension_numbers=(((1,), (1,)), ((), ())),
                        preferred_element_type=jnp.float32)        # (tq, n)
    m = jnp.max(s, axis=-1, keepdims=True)
    p = jnp.exp(s - m)                                             # f32
    l = jnp.sum(p, axis=-1, keepdims=True)
    ctx = jnp.dot(p.astype(v_ref.dtype), v_ref[...],
                  preferred_element_type=jnp.float32)              # (tq, dout)
    o_ref[...] = (ctx / l).astype(o_ref.dtype)                     # exact division


# ---------------------------------------------------------------------------
# Stage 2b: flash-style attention — online softmax over streamed KV blocks.
# ---------------------------------------------------------------------------
def _attn_flash_kernel(q_ref, k_ref, v_ref, o_ref, m_sc, l_sc, acc_sc):
    ki = pl.program_id(1)

    @pl.when(ki == 0)
    def _init():
        m_sc[...] = jnp.full_like(m_sc, -jnp.inf)
        l_sc[...] = jnp.zeros_like(l_sc)
        acc_sc[...] = jnp.zeros_like(acc_sc)

    s = lax.dot_general(q_ref[...], k_ref[...],
                        dimension_numbers=(((1,), (1,)), ((), ())),
                        preferred_element_type=jnp.float32)        # (tq, tk)

    m_prev = m_sc[...]
    m_new = jnp.maximum(m_prev, jnp.max(s, axis=-1, keepdims=True))
    alpha = jnp.exp(m_prev - m_new)
    p = jnp.exp(s - m_new)
    l_sc[...] = alpha * l_sc[...] + jnp.sum(p, axis=-1, keepdims=True)
    acc_sc[...] = alpha * acc_sc[...] + jnp.dot(p.astype(v_ref.dtype), v_ref[...],
                                                preferred_element_type=jnp.float32)
    m_sc[...] = m_new

    @pl.when(ki == pl.num_programs(1) - 1)
    def _finalize():
        # Exact division — runs once per query block, negligible cost.
        o_ref[...] = (acc_sc[...] / l_sc[...]).astype(o_ref.dtype)


# ---------------------------------------------------------------------------
# Wrapper.
# ---------------------------------------------------------------------------
def sas_v1(x, wquery, wkey, wval, *, block_q=256, block_kv=512,
           single_kv_max=1024, mxu_dtype=jnp.bfloat16, out_dtype=None,
           vmem_limit_bytes=None):
    """SASv1 forward.  x: (N, din); weights: (din, dout)."""
    n, din = x.shape
    dout = wquery.shape[1]
    out_dtype = x.dtype if out_dtype is None else out_dtype
    scale = float(dout) ** -0.5
    stream_bytes = jnp.dtype(mxu_dtype).itemsize

    # bf16 MXU operands everywhere; accumulation stays f32 inside the kernels.
    xc = x.astype(mxu_dtype)
    wq = wquery.astype(mxu_dtype)
    wk = wkey.astype(mxu_dtype)
    wv = wval.astype(mxu_dtype)

    # Stage 1: Q (pre-scaled), K, V computed exactly once — O(N*din*dout).
    q, k, v = _project(xc, wq, wk, wv, scale=scale,
                       block_rows=block_q, stream_dtype=mxu_dtype)

    tq = min(block_q, n)
    assert n % tq == 0, "sequence length must divide the query tile"
    nq = n // tq

    attn_cost = pl.CostEstimate(
        flops=2 * n * n * dout * 2,                 # QK^T + PV
        transcendentals=n * n,                      # exp
        bytes_accessed=(3 * n * dout * stream_bytes
                        + n * dout * jnp.dtype(out_dtype).itemsize),
    )

    if n <= single_kv_max:
        # Small-N fast path: one KV step -> no online-softmax rescale and no
        # cross-grid-iteration scratch state; grid steps are fully independent.
        grid_spec = pltpu.PrefetchScalarGridSpec(
            num_scalar_prefetch=0,
            grid=(nq,),
            in_specs=[
                pl.BlockSpec((tq, dout), lambda qi: (qi, 0)),
                pl.BlockSpec((n, dout), lambda qi: (0, 0)),   # K resident
                pl.BlockSpec((n, dout), lambda qi: (0, 0)),   # V resident
            ],
            out_specs=pl.BlockSpec((tq, dout), lambda qi: (qi, 0)),
        )
        return pl.pallas_call(
            _attn_single_kv_kernel,
            out_shape=jax.ShapeDtypeStruct((n, dout), out_dtype),
            grid_spec=grid_spec,
            compiler_params=pltpu.CompilerParams(
                dimension_semantics=("parallel",),
                vmem_limit_bytes=vmem_limit_bytes),
            cost_estimate=attn_cost,
        )(q, k, v)

    # General flash path: query blocks parallel (megacore on v7x), kv reduction
    # as the innermost "arbitrary" axis with a resident f32 accumulator.
    tk = min(block_kv, n)
    assert n % tk == 0, "sequence length must divide the kv tile"
    nk = n // tk

    grid_spec = pltpu.PrefetchScalarGridSpec(
        num_scalar_prefetch=0,
        grid=(nq, nk),
        in_specs=[
            pl.BlockSpec((tq, dout), lambda qi, ki: (qi, 0)),   # Q resident over ki
            pl.BlockSpec((tk, dout), lambda qi, ki: (ki, 0)),   # K streamed
            pl.BlockSpec((tk, dout), lambda qi, ki: (ki, 0)),   # V streamed
        ],
        out_specs=pl.BlockSpec((tq, dout), lambda qi, ki: (qi, 0)),
        scratch_shapes=[
            pltpu.VMEM((tq, 1), jnp.float32),      # running max m
            pltpu.VMEM((tq, 1), jnp.float32),      # running denom l
            pltpu.VMEM((tq, dout), jnp.float32),   # output accumulator
        ],
    )
    return pl.pallas_call(
        _attn_flash_kernel,
        out_shape=jax.ShapeDtypeStruct((n, dout), out_dtype),
        grid_spec=grid_spec,
        compiler_params=pltpu.CompilerParams(
            dimension_semantics=("parallel", "arbitrary"),
            vmem_limit_bytes=vmem_limit_bytes),
        cost_estimate=attn_cost,
    )(q, k, v)


def sas_v1_ref(x, wquery, wkey, wval):
    """Pure-JAX f32 reference (matches the PyTorch module)."""
    keys = x @ wkey
    queries = x @ wquery
    vals = x @ wval
    scores = queries @ keys.T
    weights = jax.nn.softmax(
        scores / jnp.sqrt(jnp.float32(wquery.shape[1])), axis=-1)
    return weights @ vals


if __name__ == "__main__":
    # Lane-dense small shapes: seq=512 gives nq=2 query blocks (balances the
    # two TensorCores on v7x); din = dout = 128.
    seq, din, dout = 512, 128, 128

    key = jax.random.PRNGKey(0)
    kx, kq, kk, kv = jax.random.split(key, 4)

    # Both x and the weights are centered so the demo softmax is
    # well-conditioned (uniform-positive weights produce O(100) logits whose
    # softmax chaotically amplifies any rounding — in f32 PyTorch as well).
    x = jax.random.uniform(kx, (seq, din), dtype=jnp.float32) - 0.5
    wquery = jax.random.uniform(kq, (din, dout), dtype=jnp.float32) - 0.5
    wkey = jax.random.uniform(kk, (din, dout), dtype=jnp.float32) - 0.5
    wval = jax.random.uniform(kv, (din, dout), dtype=jnp.float32) - 0.5

    out = jax.block_until_ready(sas_v1(x, wquery, wkey, wval))
    ref = sas_v1_ref(x, wquery, wkey, wval)

    assert out.shape == (seq, dout)
    err = float(jnp.max(jnp.abs(out.astype(jnp.float32) - ref)))
    # bf16 MXU operands vs f32 reference -> bf16-level tolerance.
    assert jnp.allclose(out.astype(jnp.float32), ref, atol=3e-2, rtol=3e-2), (
        f"mismatch vs reference, max abs err = {err}")

    print("KERNEL_OK")
</pallas_src>

<mosaic_0001>
module attributes {stable_mosaic.version = 11 : i64} {
  func.func @_project_kernel(%arg0: i32, %arg1: memref<256x128xbf16, #tpu.memory_space<vmem>>, %arg2: memref<128x128xbf16, #tpu.memory_space<vmem>>, %arg3: memref<128x128xbf16, #tpu.memory_space<vmem>>, %arg4: memref<128x128xbf16, #tpu.memory_space<vmem>>, %arg5: memref<256x128xbf16, #tpu.memory_space<vmem>>, %arg6: memref<256x128xbf16, #tpu.memory_space<vmem>>, %arg7: memref<256x128xbf16, #tpu.memory_space<vmem>>) attributes {dimension_semantics = [#tpu.dimension_semantics<parallel>], iteration_bounds = array<i64: 2>, scalar_prefetch = 0 : i64, scratch_operands = 0 : i64, tpu.core_type = #tpu.core_type<tc>, window_params = [{transform_indices = @transform_0, window_bounds = array<i64: 256, 128>}, {pipeline_mode = #tpu.pipeline_mode<synchronous>, transform_indices = @transform_1, window_bounds = array<i64: 128, 128>}, {pipeline_mode = #tpu.pipeline_mode<synchronous>, transform_indices = @transform_2, window_bounds = array<i64: 128, 128>}, {pipeline_mode = #tpu.pipeline_mode<synchronous>, transform_indices = @transform_3, window_bounds = array<i64: 128, 128>}, {transform_indices = @transform_4, window_bounds = array<i64: 256, 128>}, {transform_indices = @transform_5, window_bounds = array<i64: 256, 128>}, {transform_indices = @transform_6, window_bounds = array<i64: 256, 128>}]} {
    %c0 = arith.constant 0 : index
    %c0_0 = arith.constant 0 : index
    %0 = vector.load %arg1[%c0, %c0_0] : memref<256x128xbf16, #tpu.memory_space<vmem>>, vector<256x128xbf16>
    %c0_1 = arith.constant 0 : index
    %c0_2 = arith.constant 0 : index
    %1 = vector.load %arg2[%c0_1, %c0_2] : memref<128x128xbf16, #tpu.memory_space<vmem>>, vector<128x128xbf16>
    %cst = arith.constant dense<0.000000e+00> : vector<256x128xf32>
    %2 = tpu.matmul %0, %1, %cst {dimension_numbers = #tpu.dot_dimension_numbers<[1], [0], [0], [1], [0, 0, 1, 1], [], []>} : vector<256x128xbf16>, vector<128x128xbf16>, vector<256x128xf32> -> vector<256x128xf32>
    %cst_3 = arith.constant 0.0883883461 : f32
    %3 = vector.broadcast %cst_3 : f32 to vector<256x128xf32>
    %4 = arith.mulf %2, %3 : vector<256x128xf32>
    %c0_4 = arith.constant 0 : index
    %c0_5 = arith.constant 0 : index
    %5 = vector.load %arg3[%c0_4, %c0_5] : memref<128x128xbf16, #tpu.memory_space<vmem>>, vector<128x128xbf16>
    %cst_6 = arith.constant dense<0.000000e+00> : vector<256x128xf32>
    %6 = tpu.matmul %0, %5, %cst_6 {dimension_numbers = #tpu.dot_dimension_numbers<[1], [0], [0], [1], [0, 0, 1, 1], [], []>} : vector<256x128xbf16>, vector<128x128xbf16>, vector<256x128xf32> -> vector<256x128xf32>
    %c0_7 = arith.constant 0 : index
    %c0_8 = arith.constant 0 : index
    %7 = vector.load %arg4[%c0_7, %c0_8] : memref<128x128xbf16, #tpu.memory_space<vmem>>, vector<128x128xbf16>
    %cst_9 = arith.constant dense<0.000000e+00> : vector<256x128xf32>
    %8 = tpu.matmul %0, %7, %cst_9 {dimension_numbers = #tpu.dot_dimension_numbers<[1], [0], [0], [1], [0, 0, 1, 1], [], []>} : vector<256x128xbf16>, vector<128x128xbf16>, vector<256x128xf32> -> vector<256x128xf32>
    %9 = arith.truncf %4 : vector<256x128xf32> to vector<256x128xbf16>
    %c0_10 = arith.constant 0 : index
    %c0_11 = arith.constant 0 : index
    %10 = vector.load %arg5[%c0_10, %c0_11] : memref<256x128xbf16, #tpu.memory_space<vmem>>, vector<256x128xbf16>
    tpu.vector_store %arg5[%c0_10, %c0_11], %9 {strides = array<i32>} : memref<256x128xbf16, #tpu.memory_space<vmem>>, vector<256x128xbf16>,
    %11 = arith.truncf %6 : vector<256x128xf32> to vector<256x128xbf16>
    %c0_12 = arith.constant 0 : index
    %c0_13 = arith.constant 0 : index
    %12 = vector.load %arg6[%c0_12, %c0_13] : memref<256x128xbf16, #tpu.memory_space<vmem>>, vector<256x128xbf16>
    tpu.vector_store %arg6[%c0_12, %c0_13], %11 {strides = array<i32>} : memref<256x128xbf16, #tpu.memory_space<vmem>>, vector<256x128xbf16>,
    %13 = arith.truncf %8 : vector<256x128xf32> to vector<256x128xbf16>
    %c0_14 = arith.constant 0 : index
    %c0_15 = arith.constant 0 : index
    %14 = vector.load %arg7[%c0_14, %c0_15] : memref<256x128xbf16, #tpu.memory_space<vmem>>, vector<256x128xbf16>
    tpu.vector_store %arg7[%c0_14, %c0_15], %13 {strides = array<i32>} : memref<256x128xbf16, #tpu.memory_space<vmem>>, vector<256x128xbf16>,
    return
  }
  func.func @transform_0(%arg0: i32) -> (i32, i32) {
    %c0_i32 = arith.constant 0 : i32
    %c0_i32_0 = arith.constant 0 : i32
    return %arg0, %c0_i32 : i32, i32
  }
  func.func @transform_1(%arg0: i32) -> (i32, i32) {
    %c0_i32 = arith.constant 0 : i32
    %c0_i32_0 = arith.constant 0 : i32
    %c0_i32_1 = arith.constant 0 : i32
    return %c0_i32, %c0_i32_0 : i32, i32
  }
  func.func @transform_2(%arg0: i32) -> (i32, i32) {
    %c0_i32 = arith.constant 0 : i32
    %c0_i32_0 = arith.constant 0 : i32
    %c0_i32_1 = arith.constant 0 : i32
    return %c0_i32, %c0_i32_0 : i32, i32
  }
  func.func @transform_3(%arg0: i32) -> (i32, i32) {
    %c0_i32 = arith.constant 0 : i32
    %c0_i32_0 = arith.constant 0 : i32
    %c0_i32_1 = arith.constant 0 : i32
    return %c0_i32, %c0_i32_0 : i32, i32
  }
  func.func @transform_4(%arg0: i32) -> (i32, i32) {
    %c0_i32 = arith.constant 0 : i32
    %c0_i32_0 = arith.constant 0 : i32
    return %arg0, %c0_i32 : i32, i32
  }
  func.func @transform_5(%arg0: i32) -> (i32, i32) {
    %c0_i32 = arith.constant 0 : i32
    %c0_i32_0 = arith.constant 0 : i32
    return %arg0, %c0_i32 : i32, i32
  }
  func.func @transform_6(%arg0: i32) -> (i32, i32) {
    %c0_i32 = arith.constant 0 : i32
    %c0_i32_0 = arith.constant 0 : i32
    return %arg0, %c0_i32 : i32, i32
  }
}

</mosaic_0001>

<llo_original>
// kernel: tpu_custom_call.1
$region0: #{tpu_custom_call.1}
  #allocation0 [shape = 'u32[]', space=smem, size = 0x4, offset = 0x4, fixed_abs, tag = 'smem constant byte address 0x4 - core index']
  #allocation1 [shape = 'u32[144,128]{1,0:T(1,128)}', space=vmem, size = 0x12000, scoped, tag = 'internal scratch']
  %s0 = inlined_call_operand.hbm [shape: bf16[512,128], index: 0, kind: input, shape index: {}]
  %s1 = inlined_call_operand.hbm [shape: bf16[128,128], index: 1, kind: input, shape index: {}]
  %s2 = inlined_call_operand.hbm [shape: bf16[128,128], index: 2, kind: input, shape index: {}]
  %s3 = inlined_call_operand.hbm [shape: bf16[128,128], index: 3, kind: input, shape index: {}]
  %s4 = inlined_call_operand.hbm [shape: bf16[512,128], index: 4, kind: output, shape index: {0}]
  %s5 = inlined_call_operand.hbm [shape: bf16[512,128], index: 5, kind: output, shape index: {1}]
  %s6 = inlined_call_operand.hbm [shape: bf16[512,128], index: 6, kind: output, shape index: {2}]
  %7 = xla_tuple %s4, %s5, %s6
  %s8 = sld [smem:[#allocation0]]
  $region81: #{tpu_custom_call.1} parent=0
    _
  %s10 = ssub.s32 1, %s8
  %s11 = scalar_select 0, %s10, %s8
  $region1: #{tpu_custom_call.1} parent=0
    #allocation2 [shape = 'u8[131072]{0}', space=vmem, size = 0x20000, scoped, tag = 'input window, operand 0']
    #allocation3 [shape = 's32[2]{0}', space=sflag, size = 0x8, scoped, tag = 'scoped memory for tpu_custom_call.1']
    #allocation4 [shape = 's32[2]{0}', space=sflag, size = 0x8, scoped, tag = 'scoped memory for tpu_custom_call.1']
    #allocation5 [shape = 'u8[32768]{0}', space=vmem, size = 0x8000, scoped, tag = 'input window, operand 1, single buffered']
    #allocation6 [shape = 's32[1]{0}', space=sflag, size = 0x4, scoped, tag = 'scoped memory for tpu_custom_call.1']
    #allocation7 [shape = 'u8[32768]{0}', space=vmem, size = 0x8000, scoped, tag = 'input window, operand 2, single buffered']
    #allocation8 [shape = 'u8[32768]{0}', space=vmem, size = 0x8000, scoped, tag = 'input window, operand 3, single buffered']
    #allocation9 [shape = 's32[1]{0}', space=sflag, size = 0x4, scoped, tag = 'scoped memory for tpu_custom_call.1']
    #allocation10 [shape = 'u8[131072]{0}', space=vmem, size = 0x20000, scoped, tag = 'output window, operand 0']
    #allocation11 [shape = 'u8[131072]{0}', space=vmem, size = 0x20000, scoped, tag = 'output window, operand 1']
    #allocation12 [shape = 's32[2]{0}', space=sflag, size = 0x8, scoped, tag = 'scoped memory for tpu_custom_call.1']
    #allocation13 [shape = 'u8[131072]{0}', space=vmem, size = 0x20000, scoped, tag = 'output window, operand 2']
    %12 = vsyncpa [#allocation3], 0
    %s13 = scalar_lea.sflag [#allocation3], 1
    %14 = vsyncpa %s13, 0
    %15 = vsyncpa [#allocation6], 0
    %16 = vsyncpa [#allocation9], 0
    %17 = vsyncpa [#allocation4], 0
    %s18 = scalar_lea.sflag [#allocation4], 1
    %19 = vsyncpa %s18, 0
    %20 = vsyncpa [#allocation12], 0
    %s21 = scalar_lea.sflag [#allocation12], 1
    %22 = vsyncpa %s21, 0
    loop: start=0, step=1, limit=4
    $region2: #{tpu_custom_call.1} parent=1 // loop_pre_header
      _
    $region3: #{tpu_custom_call.1} parent=1 // loop_header
      %s24 = sphi 0, %s28
      %p25 = scmp.ge.s32.totalorder %s24, 4
      %s34 = sphi 0, %s36
      %s37 = sphi 0, %s34
      %s38 = sphi 0, %s37
      %s54 = sphi 0, %s38
      %s58 = sphi 0, %s58
      %s60 = sphi 0, %s58
      %s61 = sphi 0, %s60
      %s75 = sphi 0, %s61
      %s79 = sphi 0, %s79
      %s81 = sphi 0, %s79
      %s82 = sphi 0, %s81
      %s96 = sphi 0, %s82
      %s100 = sphi 0, %s100
      %s102 = sphi 0, %s100
      %s103 = sphi 0, %s102
      %s117 = sphi 0, %s103
      %s123 = sphi 0, %s125
      %s126 = sphi 0, %s123
      %s127 = sphi 0, %s126
      %s143 = sphi 0, %s127
      %s149 = sphi 0, %s151
      %s152 = sphi 0, %s149
      %s153 = sphi 0, %s152
      %s169 = sphi 0, %s153
      %s175 = sphi 0, %s177
      %s178 = sphi 0, %s175
      %s179 = sphi 0, %s178
      %s195 = sphi 0, %s179
    $region4: #{tpu_custom_call.1} parent=1 // loop_header_branch
      %27 = sbr.rel (%p25) target = $region8
    $region5: #{tpu_custom_call.1} parent=1 // loop_body
      %s29 = ssub.s32 %s24, 1
      %s30 = ssub.s32 %s24, 2
      %s31 = sadd.s32 %s24, 1
      %s32 = ssub.s32 %s24, %s31
      %p33 = scmp.eq.s32.totalorder %s32, 0
      %s35 = sadd.s32 %s34, 1
      %s36 = scalar_select %p33, %s34, %s35
      %p39 = pneg %p33
      %p40 = scmp.eq.s32.totalorder %s24, 1
      %p41 = por %p39, %p40
      %p42 = scmp.ne.s32.totalorder %s34, %s37
      %p43 = scmp.eq.s32.totalorder %s24, 0
      %p44 = por %p42, %p43
      %p45 = scmp.ne.s32.totalorder %s34, %s37
      %p46 = scmp.eq.s32.totalorder %s29, 1
      %p47 = por %p45, %p46
      %p48 = scmp.ne.s32.totalorder %s37, %s38
      %p49 = scmp.eq.s32.totalorder %s29, 0
      %p50 = por %p48, %p49
      %p51 = scmp.ne.s32.totalorder %s37, %s38
      %p52 = scmp.eq.s32.totalorder %s30, 1
      %p53 = por %p51, %p52
      %p55 = scmp.ne.s32.totalorder %s38, %s54
      %p56 = scmp.eq.s32.totalorder %s30, 0
      %p57 = por %p55, %p56
      %s59 = sadd.s32 %s58, 1
      %p62 = scmp.eq.s32.totalorder %s24, 1
      %p63 = scmp.ne.s32.totalorder %s58, %s60
      %p64 = scmp.eq.s32.totalorder %s24, 0
      %p65 = por %p63, %p64
      %p66 = scmp.ne.s32.totalorder %s58, %s60
      %p67 = scmp.eq.s32.totalorder %s29, 1
      %p68 = por %p66, %p67
      %p69 = scmp.ne.s32.totalorder %s60, %s61
      %p70 = scmp.eq.s32.totalorder %s29, 0
      %p71 = por %p69, %p70
      %p72 = scmp.ne.s32.totalorder %s60, %s61
      %p73 = scmp.eq.s32.totalorder %s30, 1
      %p74 = por %p72, %p73
      %p76 = scmp.ne.s32.totalorder %s61, %s75
      %p77 = scmp.eq.s32.totalorder %s30, 0
      %p78 = por %p76, %p77
      %s80 = sadd.s32 %s79, 1
      %p83 = scmp.eq.s32.totalorder %s24, 1
      %p84 = scmp.ne.s32.totalorder %s79, %s81
      %p85 = scmp.eq.s32.totalorder %s24, 0
      %p86 = por %p84, %p85
      %p87 = scmp.ne.s32.totalorder %s79, %s81
      %p88 = scmp.eq.s32.totalorder %s29, 1
      %p89 = por %p87, %p88
      %p90 = scmp.ne.s32.totalorder %s81, %s82
      %p91 = scmp.eq.s32.totalorder %s29, 0
      %p92 = por %p90, %p91
      %p93 = scmp.ne.s32.totalorder %s81, %s82
      %p94 = scmp.eq.s32.totalorder %s30, 1
      %p95 = por %p93, %p94
      %p97 = scmp.ne.s32.totalorder %s82, %s96
      %p98 = scmp.eq.s32.totalorder %s30, 0
      %p99 = por %p97, %p98
      %s101 = sadd.s32 %s100, 1
      %p104 = scmp.eq.s32.totalorder %s24, 1
      %p105 = scmp.ne.s32.totalorder %s100, %s102
      %p106 = scmp.eq.s32.totalorder %s24, 0
      %p107 = por %p105, %p106
      %p108 = scmp.ne.s32.totalorder %s100, %s102
      %p109 = scmp.eq.s32.totalorder %s29, 1
      %p110 = por %p108, %p109
      %p111 = scmp.ne.s32.totalorder %s102, %s103
      %p112 = scmp.eq.s32.totalorder %s29, 0
      %p113 = por %p111, %p112
      %p114 = scmp.ne.s32.totalorder %s102, %s103
      %p115 = scmp.eq.s32.totalorder %s30, 1
      %p116 = por %p114, %p115
      %p118 = scmp.ne.s32.totalorder %s103, %s117
      %p119 = scmp.eq.s32.totalorder %s30, 0
      %p120 = por %p118, %p119
      %s121 = ssub.s32 %s24, %s31
      %p122 = scmp.eq.s32.totalorder %s121, 0
      %s124 = sadd.s32 %s123, 1
      %s125 = scalar_select %p122, %s123, %s124
      %p128 = pneg %p122
      %p129 = scmp.eq.s32.totalorder %s24, 1
      %p130 = por %p128, %p129
      %p131 = scmp.ne.s32.totalorder %s123, %s126
      %p132 = scmp.eq.s32.totalorder %s24, 0
      %p133 = por %p131, %p132
      %p134 = scmp.ne.s32.totalorder %s123, %s126
      %p135 = scmp.eq.s32.totalorder %s29, 1
      %p136 = por %p134, %p135
      %p137 = scmp.ne.s32.totalorder %s126, %s127
      %p138 = scmp.eq.s32.totalorder %s29, 0
      %p139 = por %p137, %p138
      %p140 = scmp.ne.s32.totalorder %s126, %s127
      %p141 = scmp.eq.s32.totalorder %s30, 1
      %p142 = por %p140, %p141
      %p144 = scmp.ne.s32.totalorder %s127, %s143
      %p145 = scmp.eq.s32.totalorder %s30, 0
      %p146 = por %p144, %p145
      %s147 = ssub.s32 %s24, %s31
      %p148 = scmp.eq.s32.totalorder %s147, 0
      %s150 = sadd.s32 %s149, 1
      %s151 = scalar_select %p148, %s149, %s150
      %p154 = pneg %p148
      %p155 = scmp.eq.s32.totalorder %s24, 1
      %p156 = por %p154, %p155
      %p157 = scmp.ne.s32.totalorder %s149, %s152
      %p158 = scmp.eq.s32.totalorder %s24, 0
      %p159 = por %p157, %p158
      %p160 = scmp.ne.s32.totalorder %s149, %s152
      %p161 = scmp.eq.s32.totalorder %s29, 1
      %p162 = por %p160, %p161
      %p163 = scmp.ne.s32.totalorder %s152, %s153
      %p164 = scmp.eq.s32.totalorder %s29, 0
      %p165 = por %p163, %p164
      %p166 = scmp.ne.s32.totalorder %s152, %s153
      %p167 = scmp.eq.s32.totalorder %s30, 1
      %p168 = por %p166, %p167
      %p170 = scmp.ne.s32.totalorder %s153, %s169
      %p171 = scmp.eq.s32.totalorder %s30, 0
      %p172 = por %p170, %p171
      %s173 = ssub.s32 %s24, %s31
      %p174 = scmp.eq.s32.totalorder %s173, 0
      %s176 = sadd.s32 %s175, 1
      %s177 = scalar_select %p174, %s175, %s176
      %p180 = pneg %p174
      %p181 = scmp.eq.s32.totalorder %s24, 1
      %p182 = por %p180, %p181
      %p183 = scmp.ne.s32.totalorder %s175, %s178
      %p184 = scmp.eq.s32.totalorder %s24, 0
      %p185 = por %p183, %p184
      %p186 = scmp.ne.s32.totalorder %s175, %s178
      %p187 = scmp.eq.s32.totalorder %s29, 1
      %p188 = por %p186, %p187
      %p189 = scmp.ne.s32.totalorder %s178, %s179
      %p190 = scmp.eq.s32.totalorder %s29, 0
      %p191 = por %p189, %p190
      %p192 = scmp.ne.s32.totalorder %s178, %s179
      %p193 = scmp.eq.s32.totalorder %s30, 1
      %p194 = por %p192, %p193
      %p196 = scmp.ne.s32.totalorder %s179, %s195
      %p197 = scmp.eq.s32.totalorder %s30, 0
      %p198 = por %p196, %p197
      %p199 = scmp.le.s32.totalorder 1, %s24
      %p200 = scmp.lt.s32.totalorder %s24, 3
      %p201 = pnand %p199, %p200
      %p202 = pneg %p201
      // Predicated region
      $region9: #{tpu_custom_call.1} parent=5 // pred_check
        _
      $region10: #{tpu_custom_call.1} parent=5 // pred_check_branch
        %204 = sbr.rel (%p201) target = $region12
      $region11: #{tpu_custom_call.1} parent=5 // pred_region
        %s205 = ssub.s32 %s24, 1
        // Predicated region
        $region13: #{tpu_custom_call.1} parent=11 // pred_check
          %p206 = pneg %p71
        $region14: #{tpu_custom_call.1} parent=11 // pred_check_branch
          %208 = sbr.rel (%p206) target = $region16
        $region15: #{tpu_custom_call.1} parent=11 // pred_region
          %s210 = ssub.s32 1024, 1024
          %211 = vsyncadd [#allocation6], %s210
          %s212 = sshll.u32 [#allocation5], 4
          %s213 = int_to_ptr.vmem [resolvable:$true] %s212
          %218 = dma.hbm_to_vmem [thread:$0]  %s1, 1024, %s213, [#allocation6], 64, 64, 4
        $region16: #{tpu_custom_call.1} parent=11 // pred_fallthru
          _
        // Predicated region
        $region17: #{tpu_custom_call.1} parent=11 // pred_check
          %p219 = pneg %p92
        $region18: #{tpu_custom_call.1} parent=11 // pred_check_branch
          %221 = sbr.rel (%p219) target = $region20
        $region19: #{tpu_custom_call.1} parent=11 // pred_region
          %s223 = ssub.s32 1024, 1024
          %224 = vsyncadd [#allocation6], %s223
          %s225 = sshll.u32 [#allocation7], 4
          %s226 = int_to_ptr.vmem [resolvable:$true] %s225
          %231 = dma.hbm_to_vmem [thread:$0]  %s2, 1024, %s226, [#allocation6], 64, 64, 4
        $region20: #{tpu_custom_call.1} parent=11 // pred_fallthru
          _
        // Predicated region
        $region21: #{tpu_custom_call.1} parent=11 // pred_check
          %p232 = pneg %p113
        $region22: #{tpu_custom_call.1} parent=11 // pred_check_branch
          %234 = sbr.rel (%p232) target = $region24
        $region23: #{tpu_custom_call.1} parent=11 // pred_region
          %s236 = ssub.s32 1024, 1024
          %237 = vsyncadd [#allocation9], %s236
          %s238 = sshll.u32 [#allocation8], 4
          %s239 = int_to_ptr.vmem [resolvable:$true] %s238
          %244 = dma.hbm_to_vmem [thread:$0]  %s3, 1024, %s239, [#allocation9], 64, 64, 4
        $region24: #{tpu_custom_call.1} parent=11 // pred_fallthru
          _
      $region12: #{tpu_custom_call.1} parent=5 // pred_fallthru
        _
      %p245 = scmp.lt.s32.totalorder %s24, 2
      // Predicated region
      $region25: #{tpu_custom_call.1} parent=5 // pred_check
        %p246 = pneg %p245
      $region26: #{tpu_custom_call.1} parent=5 // pred_check_branch
        %248 = sbr.rel (%p246) target = $region28
      $region27: #{tpu_custom_call.1} parent=5 // pred_region
        // Predicated region
        $region29: #{tpu_custom_call.1} parent=27 // pred_check
          %p249 = pneg %p44
        $region30: #{tpu_custom_call.1} parent=27 // pred_check_branch
          %251 = sbr.rel (%p249) target = $region32
        $region31: #{tpu_custom_call.1} parent=27 // pred_region
          %s252 = sand.u32 %s34, 1
          %s253 = scalar_lea.sflag [#allocation3], %s252
          %s254 = sand.u32 %s34, 1
          %s255 = smul.addr %s254, 128
          %s256 = scalar_lea.vmem [#allocation2], %s255
          %s257 = smul.u32 32, %s24
          %s259 = ssub.s32 2048, 2048
          %260 = vsyncadd %s253, %s259
          %s261 = smul.addr %s257, 64
          %s262 = scalar_lea.hbm %s0, %s261
          %s263 = sshll.u32 %s256, 4
          %s264 = int_to_ptr.vmem [resolvable:$true] %s263
          %269 = dma.hbm_to_vmem [thread:$0]  %s262, 2048, %s264, %s253, 64, 64, 4
        $region32: #{tpu_custom_call.1} parent=27 // pred_fallthru
          _
      $region28: #{tpu_custom_call.1} parent=5 // pred_fallthru
        _
      %p270 = scmp.le.s32.totalorder 1, %s24
      %p271 = scmp.lt.s32.totalorder %s24, 3
      %p272 = pnand %p270, %p271
      %p273 = pneg %p272
      // Predicated region
      $region33: #{tpu_custom_call.1} parent=5 // pred_check
        _
      $region34: #{tpu_custom_call.1} parent=5 // pred_check_branch
        %275 = sbr.rel (%p272) target = $region36
      $region35: #{tpu_custom_call.1} parent=5 // pred_region
        %s276 = ssub.s32 %s24, 1
        %s277 = sand.u32 %s37, 1
        %s278 = scalar_lea.sflag [#allocation3], %s277
        %s279 = sand.u32 %s37, 1
        %s280 = smul.addr %s279, 128
        %s281 = scalar_lea.vmem [#allocation2], %s280
        // Predicated region
        $region37: #{tpu_custom_call.1} parent=35 // pred_check
          %p282 = pneg %p50
        $region38: #{tpu_custom_call.1} parent=35 // pred_check_branch
          %284 = sbr.rel (%p282) target = $region40
        $region39: #{tpu_custom_call.1} parent=35 // pred_region
          %285 = dma.done %s278, 2048
        $region40: #{tpu_custom_call.1} parent=35 // pred_fallthru
          _
        // Predicated region
        $region41: #{tpu_custom_call.1} parent=35 // pred_check
          %p286 = pneg %p71
        $region42: #{tpu_custom_call.1} parent=35 // pred_check_branch
          %288 = sbr.rel (%p286) target = $region44
        $region43: #{tpu_custom_call.1} parent=35 // pred_region
          %289 = dma.done [#allocation6], 1024
        $region44: #{tpu_custom_call.1} parent=35 // pred_fallthru
          _
        // Predicated region
        $region45: #{tpu_custom_call.1} parent=35 // pred_check
          %p290 = pneg %p92
        $region46: #{tpu_custom_call.1} parent=35 // pred_check_branch
          %292 = sbr.rel (%p290) target = $region48
        $region47: #{tpu_custom_call.1} parent=35 // pred_region
          %293 = dma.done [#allocation6], 1024
        $region48: #{tpu_custom_call.1} parent=35 // pred_fallthru
          _
        // Predicated region
        $region49: #{tpu_custom_call.1} parent=35 // pred_check
          %p294 = pneg %p113
        $region50: #{tpu_custom_call.1} parent=35 // pred_check_branch
          %296 = sbr.rel (%p294) target = $region52
        $region51: #{tpu_custom_call.1} parent=35 // pred_region
          %297 = dma.done [#allocation9], 1024
        $region52: #{tpu_custom_call.1} parent=35 // pred_fallthru
          _
        %s298 = sand.u32 %s37, 1
        %s299 = scalar_lea.sflag [#allocation3], %s298
        %s300 = sand.u32 %s37, 1
        %s301 = smul.addr %s300, 128
        %s302 = scalar_lea.vmem [#allocation2], %s301
        %p303 = pneg %p50
        %p304 = pneg %p47
        %p305 = pneg %p71
        %p306 = pneg %p68
        %p307 = pneg %p92
        %p308 = pneg %p89
        %p309 = pneg %p113
        %p310 = pneg %p110
        %p311 = pneg %p139
        %p312 = pneg %p136
        %s313 = sand.u32 %s126, 1
        %s314 = scalar_lea.sflag [#allocation4], %s313
        %s315 = sand.u32 %s126, 1
        %s316 = smul.addr %s315, 128
        %s317 = scalar_lea.vmem [#allocation10], %s316
        %p318 = pneg %p165
        %p319 = pneg %p162
        %s320 = sand.u32 %s29, 1
        %s321 = scalar_lea.sflag [#allocation12], %s320
        %s322 = sand.u32 %s152, 1
        %s323 = smul.addr %s322, 128
        %s324 = scalar_lea.vmem [#allocation11], %s323
        %p325 = pneg %p191
        %p326 = pneg %p188
        %s327 = sand.u32 %s29, 1
        %s328 = scalar_lea.sflag [#allocation12], %s327
        %s329 = sand.u32 %s178, 1
        %s330 = smul.addr %s329, 128
        %s331 = scalar_lea.vmem [#allocation13], %s330
        %s332 = smul.u32 32, %s29
        %s333 = smul.u32 32, %s29
        %s334 = smul.u32 32, %s29
        %s335 = smul.u32 32, %s29
        %v337 = vld [vmem:[%s281] sm:$0xf]
        %v338 = vld [vmem:[%s281 + $0x4] sm:$0xf]
        %v339 = vld [vmem:[%s281 + $0x8] sm:$0xf]
        %v340 = vld [vmem:[%s281 + $0xc] sm:$0xf]
        %v341 = vld [vmem:[%s281 + $0x10] sm:$0xf]
        %v342 = vld [vmem:[%s281 + $0x14] sm:$0xf]
        %v343 = vld [vmem:[%s281 + $0x18] sm:$0xf]
        %v344 = vld [vmem:[%s281 + $0x1c] sm:$0xf]
        %v345 = vld [vmem:[%s281 + $0x20] sm:$0xf]
        %v346 = vld [vmem:[%s281 + $0x24] sm:$0xf]
        %v347 = vld [vmem:[%s281 + $0x28] sm:$0xf]
        %v348 = vld [vmem:[%s281 + $0x2c] sm:$0xf]
        %v349 = vld [vmem:[%s281 + $0x30] sm:$0xf]
        %v350 = vld [vmem:[%s281 + $0x34] sm:$0xf]
        %v351 = vld [vmem:[%s281 + $0x38] sm:$0xf]
        %v352 = vld [vmem:[%s281 + $0x3c] sm:$0xf]
        %v353 = vld [vmem:[%s281 + $0x40] sm:$0xf]
        %v354 = vld [vmem:[%s281 + $0x44] sm:$0xf]
        %v355 = vld [vmem:[%s281 + $0x48] sm:$0xf]
        %v356 = vld [vmem:[%s281 + $0x4c] sm:$0xf]
        %v357 = vld [vmem:[%s281 + $0x50] sm:$0xf]
        %v358 = vld [vmem:[%s281 + $0x54] sm:$0xf]
        %v359 = vld [vmem:[%s281 + $0x58] sm:$0xf]
        %v360 = vld [vmem:[%s281 + $0x5c] sm:$0xf]
        %v361 = vld [vmem:[%s281 + $0x60] sm:$0xf]
        %v362 = vld [vmem:[%s281 + $0x64] sm:$0xf]
        %v363 = vld [vmem:[%s281 + $0x68] sm:$0xf]
        %v364 = vld [vmem:[%s281 + $0x6c] sm:$0xf]
        %v365 = vld [vmem:[%s281 + $0x70] sm:$0xf]
        %v366 = vld [vmem:[%s281 + $0x74] sm:$0xf]
        %v367 = vld [vmem:[%s281 + $0x78] sm:$0xf]
        %v368 = vld [vmem:[%s281 + $0x7c] sm:$0xf]
        %v369 = vld [vmem:[#allocation5] sm:$0xf]
        %v370 = vld [vmem:[#allocation5 + $0x4] sm:$0xf]
        %v371 = vld [vmem:[#allocation5 + $0x8] sm:$0xf]
        %v372 = vld [vmem:[#allocation5 + $0xc] sm:$0xf]
        %v373 = vld [vmem:[#allocation5 + $0x10] sm:$0xf]
        %v374 = vld [vmem:[#allocation5 + $0x14] sm:$0xf]
        %v375 = vld [vmem:[#allocation5 + $0x18] sm:$0xf]
        %v376 = vld [vmem:[#allocation5 + $0x1c] sm:$0xf]
        %v377 = vld [vmem:[#allocation5 + $0x20] sm:$0xf]
        %v378 = vld [vmem:[#allocation5 + $0x24] sm:$0xf]
        %v379 = vld [vmem:[#allocation5 + $0x28] sm:$0xf]
        %v380 = vld [vmem:[#allocation5 + $0x2c] sm:$0xf]
        %v381 = vld [vmem:[#allocation5 + $0x30] sm:$0xf]
        %v382 = vld [vmem:[#allocation5 + $0x34] sm:$0xf]
        %v383 = vld [vmem:[#allocation5 + $0x38] sm:$0xf]
        %v384 = vld [vmem:[#allocation5 + $0x3c] sm:$0xf]
        %v417 = vunpack.c.l.b16 %v337
        %v418 = vunpack.c.l.b16 %v338
        %v419 = vunpack.c.l.b16 %v339
        %v420 = vunpack.c.l.b16 %v340
        %v421 = vunpack.c.l.b16 %v341
        %v422 = vunpack.c.l.b16 %v342
        %v423 = vunpack.c.l.b16 %v343
        %v424 = vunpack.c.l.b16 %v344
        %v425 = vunpack.c.l.b16 %v345
        %v426 = vunpack.c.l.b16 %v346
        %v427 = vunpack.c.l.b16 %v347
        %v428 = vunpack.c.l.b16 %v348
        %v429 = vunpack.c.l.b16 %v349
        %v430 = vunpack.c.l.b16 %v350
        %v431 = vunpack.c.l.b16 %v351
        %v432 = vunpack.c.l.b16 %v352
        %v433 = vunpack.c.l.b16 %v353
        %v434 = vunpack.c.l.b16 %v354
        %v435 = vunpack.c.l.b16 %v355
        %v436 = vunpack.c.l.b16 %v356
        %v437 = vunpack.c.l.b16 %v357
        %v438 = vunpack.c.l.b16 %v358
        %v439 = vunpack.c.l.b16 %v359
        %v440 = vunpack.c.l.b16 %v360
        %v441 = vunpack.c.l.b16 %v361
        %v442 = vunpack.c.l.b16 %v362
        %v443 = vunpack.c.l.b16 %v363
        %v444 = vunpack.c.l.b16 %v364
        %v445 = vunpack.c.l.b16 %v365
        %v446 = vunpack.c.l.b16 %v366
        %v447 = vunpack.c.l.b16 %v367
        %v448 = vunpack.c.l.b16 %v368
        %v449 = vpack.c.b16 %v418, %v417
        %v450 = vpack.c.b16 %v420, %v419
        %v451 = vpack.c.b16 %v422, %v421
        %v452 = vpack.c.b16 %v424, %v423
        %v453 = vpack.c.b16 %v426, %v425
        %v454 = vpack.c.b16 %v428, %v427
        %v455 = vpack.c.b16 %v430, %v429
        %v456 = vpack.c.b16 %v432, %v431
        %v457 = vpack.c.b16 %v434, %v433
        %v458 = vpack.c.b16 %v436, %v435
        %v459 = vpack.c.b16 %v438, %v437
        %v460 = vpack.c.b16 %v440, %v439
        %v461 = vpack.c.b16 %v442, %v441
        %v462 = vpack.c.b16 %v444, %v443
        %v463 = vpack.c.b16 %v446, %v445
        %v464 = vpack.c.b16 %v448, %v447
        %v497 = vunpack.c.l.b16 %v369
        %v498 = vunpack.c.l.b16 %v370
        %v499 = vunpack.c.l.b16 %v371
        %v500 = vunpack.c.l.b16 %v372
        %v501 = vunpack.c.l.b16 %v373
        %v502 = vunpack.c.l.b16 %v374
        %v503 = vunpack.c.l.b16 %v375
        %v504 = vunpack.c.l.b16 %v376
        %v505 = vunpack.c.l.b16 %v377
        %v506 = vunpack.c.l.b16 %v378
        %v507 = vunpack.c.l.b16 %v379
        %v508 = vunpack.c.l.b16 %v380
        %v509 = vunpack.c.l.b16 %v381
        %v510 = vunpack.c.l.b16 %v382
        %v511 = vunpack.c.l.b16 %v383
        %v512 = vunpack.c.l.b16 %v384
        %v513 = vpack.c.b16 %v498, %v497
        %v514 = vpack.c.b16 %v500, %v499
        %v515 = vpack.c.b16 %v502, %v501
        %v516 = vpack.c.b16 %v504, %v503
        %v517 = vpack.c.b16 %v506, %v505
        %v518 = vpack.c.b16 %v508, %v507
        %v519 = vpack.c.b16 %v510, %v509
        %v520 = vpack.c.b16 %v512, %v511
        %529 = vmatprep.subr.bf16.mxu0 0
        %530 = vmatpush1.bf16.msra.mxu0 %v520
        %531 = vmatprep.subr.bf16.mxu0 0
        %532 = vmatpush1.bf16.msra.mxu0 %v519
        %533 = vmatprep.subr.bf16.mxu0 0
        %534 = vmatpush1.bf16.msra.mxu0 %v518
        %535 = vmatprep.subr.bf16.mxu0 0
        %536 = vmatpush1.bf16.msra.mxu0 %v517
        %537 = vmatprep.subr.bf16.mxu0 0
        %538 = vmatpush1.bf16.msra.mxu0 %v516
        %539 = vmatprep.subr.bf16.mxu0 0
        %540 = vmatpush1.bf16.msra.mxu0 %v515
        %541 = vmatprep.subr.bf16.mxu0 0
        %542 = vmatpush1.bf16.msra.mxu0 %v514
        %543 = vmatprep.subr.bf16.mxu0 0
        %544 = vmatpush1.bf16.msra.mxu0 %v513
        %545 = vmatprep.subr.bf16.mxu0 0
        %546 = vmatpush2.bf16.msra.mxu0 0
        %547 = vmatprep.subr.bf16.mxu0 0
        %548 = vmatpush2.bf16.msra.mxu0 0
        %549 = vmatprep.subr.bf16.mxu0 0
        %550 = vmatpush2.bf16.msra.mxu0 0
        %551 = vmatprep.subr.bf16.mxu0 0
        %552 = vmatpush2.bf16.msra.mxu0 0
        %553 = vmatprep.subr.bf16.mxu0 0
        %554 = vmatpush2.bf16.msra.mxu0 0
        %555 = vmatprep.subr.bf16.mxu0 0
        %556 = vmatpush2.bf16.msra.mxu0 0
        %557 = vmatprep.subr.bf16.mxu0 0
        %558 = vmatpush2.bf16.msra.mxu0 0
        %559 = vmatprep.subr.bf16.mxu0 0
        %560 = vmatpush2.bf16.msra.mxu0 0
        %561 = vmatprep.mubr.bf16.mxu0 0
        %562 = vmatmul.mubr.bf16.gmra.mxu0 %v449
        %v563 = vpop.f32.mrf.mxu0
        %v564 = vadd.f32 0.0, %v563
        %v565 = vpop.f32.mrf.mxu0
        %v566 = vpop.f32.mrf.mxu0
        %v567 = vadd.f32 0.0, %v566
        %v568 = vpop.f32.mrf.mxu0
        %569 = vmatprep.mubr.bf16.mxu0 0
        %570 = vmatmul.mubr.bf16.gmra.mxu0 %v450
        %v571 = vpop.f32.mrf.mxu0
        %v572 = vadd.f32 0.0, %v571
        %v573 = vpop.f32.mrf.mxu0
        %v574 = vpop.f32.mrf.mxu0
        %v575 = vadd.f32 0.0, %v574
        %v576 = vpop.f32.mrf.mxu0
        %577 = vmatprep.mubr.bf16.mxu0 0
        %578 = vmatmul.mubr.bf16.gmra.mxu0 %v451
        %v579 = vpop.f32.mrf.mxu0
        %v580 = vadd.f32 0.0, %v579
        %v581 = vpop.f32.mrf.mxu0
        %v582 = vpop.f32.mrf.mxu0
        %v583 = vadd.f32 0.0, %v582
        %v584 = vpop.f32.mrf.mxu0
        %585 = vmatprep.mubr.bf16.mxu0 0
        %586 = vmatmul.mubr.bf16.gmra.mxu0 %v452
        %v587 = vpop.f32.mrf.mxu0
        %v588 = vadd.f32 0.0, %v587
        %v589 = vpop.f32.mrf.mxu0
        %v590 = vpop.f32.mrf.mxu0
        %v591 = vadd.f32 0.0, %v590
        %v592 = vpop.f32.mrf.mxu0
        %593 = vmatprep.mubr.bf16.mxu0 0
        %594 = vmatmul.mubr.bf16.gmra.mxu0 %v453
        %v595 = vpop.f32.mrf.mxu0
        %v596 = vadd.f32 0.0, %v595
        %v597 = vpop.f32.mrf.mxu0
        %v598 = vpop.f32.mrf.mxu0
        %v599 = vadd.f32 0.0, %v598
        %v600 = vpop.f32.mrf.mxu0
        %601 = vmatprep.mubr.bf16.mxu0 0
        %602 = vmatmul.mubr.bf16.gmra.mxu0 %v454
        %v603 = vpop.f32.mrf.mxu0
        %v604 = vadd.f32 0.0, %v603
        %v605 = vpop.f32.mrf.mxu0
        %v606 = vpop.f32.mrf.mxu0
        %v607 = vadd.f32 0.0, %v606
        %v608 = vpop.f32.mrf.mxu0
        %609 = vmatprep.mubr.bf16.mxu0 0
        %610 = vmatmul.mubr.bf16.gmra.mxu0 %v455
        %v611 = vpop.f32.mrf.mxu0
        %v612 = vadd.f32 0.0, %v611
        %v613 = vpop.f32.mrf.mxu0
        %v614 = vpop.f32.mrf.mxu0
        %v615 = vadd.f32 0.0, %v614
        %v616 = vpop.f32.mrf.mxu0
        %617 = vmatprep.mubr.bf16.mxu0 0
        %618 = vmatmul.mubr.bf16.gmra.mxu0 %v456
        %v619 = vpop.f32.mrf.mxu0
        %v620 = vadd.f32 0.0, %v619
        %v621 = vpop.f32.mrf.mxu0
        %v622 = vpop.f32.mrf.mxu0
        %v623 = vadd.f32 0.0, %v622
        %v624 = vpop.f32.mrf.mxu0
        %625 = vmatprep.mubr.bf16.mxu0 0
        %626 = vmatmul.mubr.bf16.gmra.mxu0 %v457
        %v627 = vpop.f32.mrf.mxu0
        %v628 = vadd.f32 0.0, %v627
        %v629 = vpop.f32.mrf.mxu0
        %v630 = vpop.f32.mrf.mxu0
        %v631 = vadd.f32 0.0, %v630
        %v632 = vpop.f32.mrf.mxu0
        %633 = vmatprep.mubr.bf16.mxu0 0
        %634 = vmatmul.mubr.bf16.gmra.mxu0 %v458
        %v635 = vpop.f32.mrf.mxu0
        %v636 = vadd.f32 0.0, %v635
        %v637 = vpop.f32.mrf.mxu0
        %v638 = vpop.f32.mrf.mxu0
        %v639 = vadd.f32 0.0, %v638
        %v640 = vpop.f32.mrf.mxu0
        %641 = vmatprep.mubr.bf16.mxu0 0
        %642 = vmatmul.mubr.bf16.gmra.mxu0 %v459
        %v643 = vpop.f32.mrf.mxu0
        %v644 = vadd.f32 0.0, %v643
        %v645 = vpop.f32.mrf.mxu0
        %v646 = vpop.f32.mrf.mxu0
        %v647 = vadd.f32 0.0, %v646
        %v648 = vpop.f32.mrf.mxu0
        %649 = vmatprep.mubr.bf16.mxu0 0
        %650 = vmatmul.mubr.bf16.gmra.mxu0 %v460
        %v651 = vpop.f32.mrf.mxu0
        %v652 = vadd.f32 0.0, %v651
        %v653 = vpop.f32.mrf.mxu0
        %v654 = vpop.f32.mrf.mxu0
        %v655 = vadd.f32 0.0, %v654
        %v656 = vpop.f32.mrf.mxu0
        %657 = vmatprep.mubr.bf16.mxu0 0
        %658 = vmatmul.mubr.bf16.gmra.mxu0 %v461
        %v659 = vpop.f32.mrf.mxu0
        %v660 = vadd.f32 0.0, %v659
        %v661 = vpop.f32.mrf.mxu0
        %v662 = vpop.f32.mrf.mxu0
        %v663 = vadd.f32 0.0, %v662
        %v664 = vpop.f32.mrf.mxu0
        %665 = vmatprep.mubr.bf16.mxu0 0
        %666 = vmatmul.mubr.bf16.gmra.mxu0 %v462
        %v667 = vpop.f32.mrf.mxu0
        %v668 = vadd.f32 0.0, %v667
        %v669 = vpop.f32.mrf.mxu0
        %v670 = vpop.f32.mrf.mxu0
        %v671 = vadd.f32 0.0, %v670
        %v672 = vpop.f32.mrf.mxu0
        %673 = vmatprep.mubr.bf16.mxu0 0
        %674 = vmatmul.mubr.bf16.gmra.mxu0 %v463
        %v675 = vpop.f32.mrf.mxu0
        %v676 = vadd.f32 0.0, %v675
        %v677 = vpop.f32.mrf.mxu0
        %v678 = vpop.f32.mrf.mxu0
        %v679 = vadd.f32 0.0, %v678
        %v680 = vpop.f32.mrf.mxu0
        %681 = vmatprep.mubr.bf16.mxu0 0
        %682 = vmatmul.mubr.bf16.gmra.mxu0 %v464
        %v683 = vpop.f32.mrf.mxu0
        %v684 = vadd.f32 0.0, %v683
        %v685 = vpop.f32.mrf.mxu0
        %v686 = vpop.f32.mrf.mxu0
        %v687 = vadd.f32 0.0, %v686
        %v688 = vpop.f32.mrf.mxu0
        %689 = vdwg.mxu0
        %v690 = vmul.f32 %v564, 0.088388346
        %v691 = vmul.f32 %v567, 0.088388346
        %v692 = vmul.f32 %v572, 0.088388346
        %v693 = vmul.f32 %v575, 0.088388346
        %v694 = vmul.f32 %v580, 0.088388346
        %v695 = vmul.f32 %v583, 0.088388346
        %v696 = vmul.f32 %v588, 0.088388346
        %v697 = vmul.f32 %v591, 0.088388346
        %v698 = vmul.f32 %v596, 0.088388346
        %v699 = vmul.f32 %v599, 0.088388346
        %v700 = vmul.f32 %v604, 0.088388346
        %v701 = vmul.f32 %v607, 0.088388346
        %v702 = vmul.f32 %v612, 0.088388346
        %v703 = vmul.f32 %v615, 0.088388346
        %v704 = vmul.f32 %v620, 0.088388346
        %v705 = vmul.f32 %v623, 0.088388346
        %v706 = vmul.f32 %v628, 0.088388346
        %v707 = vmul.f32 %v631, 0.088388346
        %v708 = vmul.f32 %v636, 0.088388346
        %v709 = vmul.f32 %v639, 0.088388346
        %v710 = vmul.f32 %v644, 0.088388346
        %v711 = vmul.f32 %v647, 0.088388346
        %v712 = vmul.f32 %v652, 0.088388346
        %v713 = vmul.f32 %v655, 0.088388346
        %v714 = vmul.f32 %v660, 0.088388346
        %v715 = vmul.f32 %v663, 0.088388346
        %v716 = vmul.f32 %v668, 0.088388346
        %v717 = vmul.f32 %v671, 0.088388346
        %v718 = vmul.f32 %v676, 0.088388346
        %v719 = vmul.f32 %v679, 0.088388346
        %v720 = vmul.f32 %v684, 0.088388346
        %v721 = vmul.f32 %v687, 0.088388346
        %v722 = vld [vmem:[#allocation7] sm:$0xf]
        %v723 = vld [vmem:[#allocation7 + $0x4] sm:$0xf]
        %v724 = vld [vmem:[#allocation7 + $0x8] sm:$0xf]
        %v725 = vld [vmem:[#allocation7 + $0xc] sm:$0xf]
        %v726 = vld [vmem:[#allocation7 + $0x10] sm:$0xf]
        %v727 = vld [vmem:[#allocation7 + $0x14] sm:$0xf]
        %v728 = vld [vmem:[#allocation7 + $0x18] sm:$0xf]
        %v729 = vld [vmem:[#allocation7 + $0x1c] sm:$0xf]
        %v730 = vld [vmem:[#allocation7 + $0x20] sm:$0xf]
        %v731 = vld [vmem:[#allocation7 + $0x24] sm:$0xf]
        %v732 = vld [vmem:[#allocation7 + $0x28] sm:$0xf]
        %v733 = vld [vmem:[#allocation7 + $0x2c] sm:$0xf]
        %v734 = vld [vmem:[#allocation7 + $0x30] sm:$0xf]
        %v735 = vld [vmem:[#allocation7 + $0x34] sm:$0xf]
        %v736 = vld [vmem:[#allocation7 + $0x38] sm:$0xf]
        %v737 = vld [vmem:[#allocation7 + $0x3c] sm:$0xf]
        %v754 = vunpack.c.l.b16 %v722
        %v755 = vunpack.c.l.b16 %v723
        %v756 = vunpack.c.l.b16 %v724
        %v757 = vunpack.c.l.b16 %v725
        %v758 = vunpack.c.l.b16 %v726
        %v759 = vunpack.c.l.b16 %v727
        %v760 = vunpack.c.l.b16 %v728
        %v761 = vunpack.c.l.b16 %v729
        %v762 = vunpack.c.l.b16 %v730
        %v763 = vunpack.c.l.b16 %v731
        %v764 = vunpack.c.l.b16 %v732
        %v765 = vunpack.c.l.b16 %v733
        %v766 = vunpack.c.l.b16 %v734
        %v767 = vunpack.c.l.b16 %v735
        %v768 = vunpack.c.l.b16 %v736
        %v769 = vunpack.c.l.b16 %v737
        %v770 = vpack.c.b16 %v755, %v754
        %v771 = vpack.c.b16 %v757, %v756
        %v772 = vpack.c.b16 %v759, %v758
        %v773 = vpack.c.b16 %v761, %v760
        %v774 = vpack.c.b16 %v763, %v762
        %v775 = vpack.c.b16 %v765, %v764
        %v776 = vpack.c.b16 %v767, %v766
        %v777 = vpack.c.b16 %v769, %v768
        %786 = vmatprep.subr.bf16.mxu0 0
        %787 = vmatpush1.bf16.msra.mxu0 %v777
        %788 = vmatprep.subr.bf16.mxu0 0
        %789 = vmatpush1.bf16.msra.mxu0 %v776
        %790 = vmatprep.subr.bf16.mxu0 0
        %791 = vmatpush1.bf16.msra.mxu0 %v775
        %792 = vmatprep.subr.bf16.mxu0 0
        %793 = vmatpush1.bf16.msra.mxu0 %v774
        %794 = vmatprep.subr.bf16.mxu0 0
        %795 = vmatpush1.bf16.msra.mxu0 %v773
        %796 = vmatprep.subr.bf16.mxu0 0
        %797 = vmatpush1.bf16.msra.mxu0 %v772
        %798 = vmatprep.subr.bf16.mxu0 0
        %799 = vmatpush1.bf16.msra.mxu0 %v771
        %800 = vmatprep.subr.bf16.mxu0 0
        %801 = vmatpush1.bf16.msra.mxu0 %v770
        %802 = vmatprep.subr.bf16.mxu0 0
        %803 = vmatpush2.bf16.msra.mxu0 0
        %804 = vmatprep.subr.bf16.mxu0 0
        %805 = vmatpush2.bf16.msra.mxu0 0
        %806 = vmatprep.subr.bf16.mxu0 0
        %807 = vmatpush2.bf16.msra.mxu0 0
        %808 = vmatprep.subr.bf16.mxu0 0
        %809 = vmatpush2.bf16.msra.mxu0 0
        %810 = vmatprep.subr.bf16.mxu0 0
        %811 = vmatpush2.bf16.msra.mxu0 0
        %812 = vmatprep.subr.bf16.mxu0 0
        %813 = vmatpush2.bf16.msra.mxu0 0
        %814 = vmatprep.subr.bf16.mxu0 0
        %815 = vmatpush2.bf16.msra.mxu0 0
        %816 = vmatprep.subr.bf16.mxu0 0
        %817 = vmatpush2.bf16.msra.mxu0 0
        %818 = vmatprep.mubr.bf16.mxu0 0
        %819 = vmatmul.mubr.bf16.gmra.mxu0 %v449
        %v820 = vpop.f32.mrf.mxu0
        %v821 = vadd.f32 0.0, %v820
        %v822 = vpop.f32.mrf.mxu0
        %v823 = vpop.f32.mrf.mxu0
        %v824 = vadd.f32 0.0, %v823
        %v825 = vpop.f32.mrf.mxu0
        %826 = vmatprep.mubr.bf16.mxu0 0
        %827 = vmatmul.mubr.bf16.gmra.mxu0 %v450
        %v828 = vpop.f32.mrf.mxu0
        %v829 = vadd.f32 0.0, %v828
        %v830 = vpop.f32.mrf.mxu0
        %v831 = vpop.f32.mrf.mxu0
        %v832 = vadd.f32 0.0, %v831
        %v833 = vpop.f32.mrf.mxu0
        %834 = vmatprep.mubr.bf16.mxu0 0
        %835 = vmatmul.mubr.bf16.gmra.mxu0 %v451
        %v836 = vpop.f32.mrf.mxu0
        %v837 = vadd.f32 0.0, %v836
        %v838 = vpop.f32.mrf.mxu0
        %v839 = vpop.f32.mrf.mxu0
        %v840 = vadd.f32 0.0, %v839
        %v841 = vpop.f32.mrf.mxu0
        %842 = vmatprep.mubr.bf16.mxu0 0
        %843 = vmatmul.mubr.bf16.gmra.mxu0 %v452
        %v844 = vpop.f32.mrf.mxu0
        %v845 = vadd.f32 0.0, %v844
        %v846 = vpop.f32.mrf.mxu0
        %v847 = vpop.f32.mrf.mxu0
        %v848 = vadd.f32 0.0, %v847
        %v849 = vpop.f32.mrf.mxu0
        %850 = vmatprep.mubr.bf16.mxu0 0
        %851 = vmatmul.mubr.bf16.gmra.mxu0 %v453
        %v852 = vpop.f32.mrf.mxu0
        %v853 = vadd.f32 0.0, %v852
        %v854 = vpop.f32.mrf.mxu0
        %v855 = vpop.f32.mrf.mxu0
        %v856 = vadd.f32 0.0, %v855
        %v857 = vpop.f32.mrf.mxu0
        %858 = vmatprep.mubr.bf16.mxu0 0
        %859 = vmatmul.mubr.bf16.gmra.mxu0 %v454
        %v860 = vpop.f32.mrf.mxu0
        %v861 = vadd.f32 0.0, %v860
        %v862 = vpop.f32.mrf.mxu0
        %v863 = vpop.f32.mrf.mxu0
        %v864 = vadd.f32 0.0, %v863
        %v865 = vpop.f32.mrf.mxu0
        %866 = vmatprep.mubr.bf16.mxu0 0
        %867 = vmatmul.mubr.bf16.gmra.mxu0 %v455
        %v868 = vpop.f32.mrf.mxu0
        %v869 = vadd.f32 0.0, %v868
        %v870 = vpop.f32.mrf.mxu0
        %v871 = vpop.f32.mrf.mxu0
        %v872 = vadd.f32 0.0, %v871
        %v873 = vpop.f32.mrf.mxu0
        %874 = vmatprep.mubr.bf16.mxu0 0
        %875 = vmatmul.mubr.bf16.gmra.mxu0 %v456
        %v876 = vpop.f32.mrf.mxu0
        %v877 = vadd.f32 0.0, %v876
        %v878 = vpop.f32.mrf.mxu0
        %v879 = vpop.f32.mrf.mxu0
        %v880 = vadd.f32 0.0, %v879
        %v881 = vpop.f32.mrf.mxu0
        %882 = vmatprep.mubr.bf16.mxu0 0
        %883 = vmatmul.mubr.bf16.gmra.mxu0 %v457
        %v884 = vpop.f32.mrf.mxu0
        %v885 = vadd.f32 0.0, %v884
        %v886 = vpop.f32.mrf.mxu0
        %v887 = vpop.f32.mrf.mxu0
        %v888 = vadd.f32 0.0, %v887
        %v889 = vpop.f32.mrf.mxu0
        %890 = vmatprep.mubr.bf16.mxu0 0
        %891 = vmatmul.mubr.bf16.gmra.mxu0 %v458
        %v892 = vpop.f32.mrf.mxu0
        %v893 = vadd.f32 0.0, %v892
        %v894 = vpop.f32.mrf.mxu0
        %v895 = vpop.f32.mrf.mxu0
        %v896 = vadd.f32 0.0, %v895
        %v897 = vpop.f32.mrf.mxu0
        %898 = vmatprep.mubr.bf16.mxu0 0
        %899 = vmatmul.mubr.bf16.gmra.mxu0 %v459
        %v900 = vpop.f32.mrf.mxu0
        %v901 = vadd.f32 0.0, %v900
        %v902 = vpop.f32.mrf.mxu0
        %v903 = vpop.f32.mrf.mxu0
        %v904 = vadd.f32 0.0, %v903
        %v905 = vpop.f32.mrf.mxu0
        %906 = vmatprep.mubr.bf16.mxu0 0
        %907 = vmatmul.mubr.bf16.gmra.mxu0 %v460
        %v908 = vpop.f32.mrf.mxu0
        %v909 = vadd.f32 0.0, %v908
        %v910 = vpop.f32.mrf.mxu0
        %v911 = vpop.f32.mrf.mxu0
        %v912 = vadd.f32 0.0, %v911
        %v913 = vpop.f32.mrf.mxu0
        %914 = vmatprep.mubr.bf16.mxu0 0
        %915 = vmatmul.mubr.bf16.gmra.mxu0 %v461
        %v916 = vpop.f32.mrf.mxu0
        %v917 = vadd.f32 0.0, %v916
        %v918 = vpop.f32.mrf.mxu0
        %v919 = vpop.f32.mrf.mxu0
        %v920 = vadd.f32 0.0, %v919
        %v921 = vpop.f32.mrf.mxu0
        %922 = vmatprep.mubr.bf16.mxu0 0
        %923 = vmatmul.mubr.bf16.gmra.mxu0 %v462
        %v924 = vpop.f32.mrf.mxu0
        %v925 = vadd.f32 0.0, %v924
        %v926 = vpop.f32.mrf.mxu0
        %v927 = vpop.f32.mrf.mxu0
        %v928 = vadd.f32 0.0, %v927
        %v929 = vpop.f32.mrf.mxu0
        %930 = vmatprep.mubr.bf16.mxu0 0
        %931 = vmatmul.mubr.bf16.gmra.mxu0 %v463
        %v932 = vpop.f32.mrf.mxu0
        %v933 = vadd.f32 0.0, %v932
        %v934 = vpop.f32.mrf.mxu0
        %v935 = vpop.f32.mrf.mxu0
        %v936 = vadd.f32 0.0, %v935
        %v937 = vpop.f32.mrf.mxu0
        %938 = vmatprep.mubr.bf16.mxu0 0
        %939 = vmatmul.mubr.bf16.gmra.mxu0 %v464
        %v940 = vpop.f32.mrf.mxu0
        %v941 = vadd.f32 0.0, %v940
        %v942 = vpop.f32.mrf.mxu0
        %v943 = vpop.f32.mrf.mxu0
        %v944 = vadd.f32 0.0, %v943
        %v945 = vpop.f32.mrf.mxu0
        %946 = vdwg.mxu0
        %v947 = vld [vmem:[#allocation8] sm:$0xf]
        %v948 = vld [vmem:[#allocation8 + $0x4] sm:$0xf]
        %v949 = vld [vmem:[#allocation8 + $0x8] sm:$0xf]
        %v950 = vld [vmem:[#allocation8 + $0xc] sm:$0xf]
        %v951 = vld [vmem:[#allocation8 + $0x10] sm:$0xf]
        %v952 = vld [vmem:[#allocation8 + $0x14] sm:$0xf]
        %v953 = vld [vmem:[#allocation8 + $0x18] sm:$0xf]
        %v954 = vld [vmem:[#allocation8 + $0x1c] sm:$0xf]
        %v955 = vld [vmem:[#allocation8 + $0x20] sm:$0xf]
        %v956 = vld [vmem:[#allocation8 + $0x24] sm:$0xf]
        %v957 = vld [vmem:[#allocation8 + $0x28] sm:$0xf]
        %v958 = vld [vmem:[#allocation8 + $0x2c] sm:$0xf]
        %v959 = vld [vmem:[#allocation8 + $0x30] sm:$0xf]
        %v960 = vld [vmem:[#allocation8 + $0x34] sm:$0xf]
        %v961 = vld [vmem:[#allocation8 + $0x38] sm:$0xf]
        %v962 = vld [vmem:[#allocation8 + $0x3c] sm:$0xf]
        %v979 = vunpack.c.l.b16 %v947
        %v980 = vunpack.c.l.b16 %v948
        %v981 = vunpack.c.l.b16 %v949
        %v982 = vunpack.c.l.b16 %v950
        %v983 = vunpack.c.l.b16 %v951
        %v984 = vunpack.c.l.b16 %v952
        %v985 = vunpack.c.l.b16 %v953
        %v986 = vunpack.c.l.b16 %v954
        %v987 = vunpack.c.l.b16 %v955
        %v988 = vunpack.c.l.b16 %v956
        %v989 = vunpack.c.l.b16 %v957
        %v990 = vunpack.c.l.b16 %v958
        %v991 = vunpack.c.l.b16 %v959
        %v992 = vunpack.c.l.b16 %v960
        %v993 = vunpack.c.l.b16 %v961
        %v994 = vunpack.c.l.b16 %v962
        %v995 = vpack.c.b16 %v980, %v979
        %v996 = vpack.c.b16 %v982, %v981
        %v997 = vpack.c.b16 %v984, %v983
        %v998 = vpack.c.b16 %v986, %v985
        %v999 = vpack.c.b16 %v988, %v987
        %v1000 = vpack.c.b16 %v990, %v989
        %v1001 = vpack.c.b16 %v992, %v991
        %v1002 = vpack.c.b16 %v994, %v993
        %1011 = vmatprep.subr.bf16.mxu0 0
        %1012 = vmatpush1.bf16.msra.mxu0 %v1002
        %1013 = vmatprep.subr.bf16.mxu0 0
        %1014 = vmatpush1.bf16.msra.mxu0 %v1001
        %1015 = vmatprep.subr.bf16.mxu0 0
        %1016 = vmatpush1.bf16.msra.mxu0 %v1000
        %1017 = vmatprep.subr.bf16.mxu0 0
        %1018 = vmatpush1.bf16.msra.mxu0 %v999
        %1019 = vmatprep.subr.bf16.mxu0 0
        %1020 = vmatpush1.bf16.msra.mxu0 %v998
        %1021 = vmatprep.subr.bf16.mxu0 0
        %1022 = vmatpush1.bf16.msra.mxu0 %v997
        %1023 = vmatprep.subr.bf16.mxu0 0
        %1024 = vmatpush1.bf16.msra.mxu0 %v996
        %1025 = vmatprep.subr.bf16.mxu0 0
        %1026 = vmatpush1.bf16.msra.mxu0 %v995
        %1027 = vmatprep.subr.bf16.mxu0 0
        %1028 = vmatpush2.bf16.msra.mxu0 0
        %1029 = vmatprep.subr.bf16.mxu0 0
        %1030 = vmatpush2.bf16.msra.mxu0 0
        %1031 = vmatprep.subr.bf16.mxu0 0
        %1032 = vmatpush2.bf16.msra.mxu0 0
        %1033 = vmatprep.subr.bf16.mxu0 0
        %1034 = vmatpush2.bf16.msra.mxu0 0
        %1035 = vmatprep.subr.bf16.mxu0 0
        %1036 = vmatpush2.bf16.msra.mxu0 0
        %1037 = vmatprep.subr.bf16.mxu0 0
        %1038 = vmatpush2.bf16.msra.mxu0 0
        %1039 = vmatprep.subr.bf16.mxu0 0
        %1040 = vmatpush2.bf16.msra.mxu0 0
        %1041 = vmatprep.subr.bf16.mxu0 0
        %1042 = vmatpush2.bf16.msra.mxu0 0
        %1043 = vmatprep.mubr.bf16.mxu0 0
        %1044 = vmatmul.mubr.bf16.gmra.mxu0 %v449
        %v1045 = vpop.f32.mrf.mxu0
        %v1046 = vadd.f32 0.0, %v1045
        %v1047 = vpop.f32.mrf.mxu0
        %v1048 = vpop.f32.mrf.mxu0
        %v1049 = vadd.f32 0.0, %v1048
        %v1050 = vpop.f32.mrf.mxu0
        %1051 = vmatprep.mubr.bf16.mxu0 0
        %1052 = vmatmul.mubr.bf16.gmra.mxu0 %v450
        %v1053 = vpop.f32.mrf.mxu0
        %v1054 = vadd.f32 0.0, %v1053
        %v1055 = vpop.f32.mrf.mxu0
        %v1056 = vpop.f32.mrf.mxu0
        %v1057 = vadd.f32 0.0, %v1056
        %v1058 = vpop.f32.mrf.mxu0
        %1059 = vmatprep.mubr.bf16.mxu0 0
        %1060 = vmatmul.mubr.bf16.gmra.mxu0 %v451
        %v1061 = vpop.f32.mrf.mxu0
        %v1062 = vadd.f32 0.0, %v1061
        %v1063 = vpop.f32.mrf.mxu0
        %v1064 = vpop.f32.mrf.mxu0
        %v1065 = vadd.f32 0.0, %v1064
        %v1066 = vpop.f32.mrf.mxu0
        %1067 = vmatprep.mubr.bf16.mxu0 0
        %1068 = vmatmul.mubr.bf16.gmra.mxu0 %v452
        %v1069 = vpop.f32.mrf.mxu0
        %v1070 = vadd.f32 0.0, %v1069
        %v1071 = vpop.f32.mrf.mxu0
        %v1072 = vpop.f32.mrf.mxu0
        %v1073 = vadd.f32 0.0, %v1072
        %v1074 = vpop.f32.mrf.mxu0
        %1075 = vmatprep.mubr.bf16.mxu0 0
        %1076 = vmatmul.mubr.bf16.gmra.mxu0 %v453
        %v1077 = vpop.f32.mrf.mxu0
        %v1078 = vadd.f32 0.0, %v1077
        %v1079 = vpop.f32.mrf.mxu0
        %v1080 = vpop.f32.mrf.mxu0
        %v1081 = vadd.f32 0.0, %v1080
        %v1082 = vpop.f32.mrf.mxu0
        %1083 = vmatprep.mubr.bf16.mxu0 0
        %1084 = vmatmul.mubr.bf16.gmra.mxu0 %v454
        %v1085 = vpop.f32.mrf.mxu0
        %v1086 = vadd.f32 0.0, %v1085
        %v1087 = vpop.f32.mrf.mxu0
        %v1088 = vpop.f32.mrf.mxu0
        %v1089 = vadd.f32 0.0, %v1088
        %v1090 = vpop.f32.mrf.mxu0
        %1091 = vmatprep.mubr.bf16.mxu0 0
        %1092 = vmatmul.mubr.bf16.gmra.mxu0 %v455
        %v1093 = vpop.f32.mrf.mxu0
        %v1094 = vadd.f32 0.0, %v1093
        %v1095 = vpop.f32.mrf.mxu0
        %v1096 = vpop.f32.mrf.mxu0
        %v1097 = vadd.f32 0.0, %v1096
        %v1098 = vpop.f32.mrf.mxu0
        %1099 = vmatprep.mubr.bf16.mxu0 0
        %1100 = vmatmul.mubr.bf16.gmra.mxu0 %v456
        %v1101 = vpop.f32.mrf.mxu0
        %v1102 = vadd.f32 0.0, %v1101
        %v1103 = vpop.f32.mrf.mxu0
        %v1104 = vpop.f32.mrf.mxu0
        %v1105 = vadd.f32 0.0, %v1104
        %v1106 = vpop.f32.mrf.mxu0
        %1107 = vmatprep.mubr.bf16.mxu0 0
        %1108 = vmatmul.mubr.bf16.gmra.mxu0 %v457
        %v1109 = vpop.f32.mrf.mxu0
        %v1110 = vadd.f32 0.0, %v1109
        %v1111 = vpop.f32.mrf.mxu0
        %v1112 = vpop.f32.mrf.mxu0
        %v1113 = vadd.f32 0.0, %v1112
        %v1114 = vpop.f32.mrf.mxu0
        %1115 = vmatprep.mubr.bf16.mxu0 0
        %1116 = vmatmul.mubr.bf16.gmra.mxu0 %v458
        %v1117 = vpop.f32.mrf.mxu0
        %v1118 = vadd.f32 0.0, %v1117
        %v1119 = vpop.f32.mrf.mxu0
        %v1120 = vpop.f32.mrf.mxu0
        %v1121 = vadd.f32 0.0, %v1120
        %v1122 = vpop.f32.mrf.mxu0
        %1123 = vmatprep.mubr.bf16.mxu0 0
        %1124 = vmatmul.mubr.bf16.gmra.mxu0 %v459
        %v1125 = vpop.f32.mrf.mxu0
        %v1126 = vadd.f32 0.0, %v1125
        %v1127 = vpop.f32.mrf.mxu0
        %v1128 = vpop.f32.mrf.mxu0
        %v1129 = vadd.f32 0.0, %v1128
        %v1130 = vpop.f32.mrf.mxu0
        %1131 = vmatprep.mubr.bf16.mxu0 0
        %1132 = vmatmul.mubr.bf16.gmra.mxu0 %v460
        %v1133 = vpop.f32.mrf.mxu0
        %v1134 = vadd.f32 0.0, %v1133
        %v1135 = vpop.f32.mrf.mxu0
        %v1136 = vpop.f32.mrf.mxu0
        %v1137 = vadd.f32 0.0, %v1136
        %v1138 = vpop.f32.mrf.mxu0
        %1139 = vmatprep.mubr.bf16.mxu0 0
        %1140 = vmatmul.mubr.bf16.gmra.mxu0 %v461
        %v1141 = vpop.f32.mrf.mxu0
        %v1142 = vadd.f32 0.0, %v1141
        %v1143 = vpop.f32.mrf.mxu0
        %v1144 = vpop.f32.mrf.mxu0
        %v1145 = vadd.f32 0.0, %v1144
        %v1146 = vpop.f32.mrf.mxu0
        %1147 = vmatprep.mubr.bf16.mxu0 0
        %1148 = vmatmul.mubr.bf16.gmra.mxu0 %v462
        %v1149 = vpop.f32.mrf.mxu0
        %v1150 = vadd.f32 0.0, %v1149
        %v1151 = vpop.f32.mrf.mxu0
        %v1152 = vpop.f32.mrf.mxu0
        %v1153 = vadd.f32 0.0, %v1152
        %v1154 = vpop.f32.mrf.mxu0
        %1155 = vmatprep.mubr.bf16.mxu0 0
        %1156 = vmatmul.mubr.bf16.gmra.mxu0 %v463
        %v1157 = vpop.f32.mrf.mxu0
        %v1158 = vadd.f32 0.0, %v1157
        %v1159 = vpop.f32.mrf.mxu0
        %v1160 = vpop.f32.mrf.mxu0
        %v1161 = vadd.f32 0.0, %v1160
        %v1162 = vpop.f32.mrf.mxu0
        %1163 = vmatprep.mubr.bf16.mxu0 0
        %1164 = vmatmul.mubr.bf16.gmra.mxu0 %v464
        %v1165 = vpop.f32.mrf.mxu0
        %v1166 = vadd.f32 0.0, %v1165
        %v1167 = vpop.f32.mrf.mxu0
        %v1168 = vpop.f32.mrf.mxu0
        %v1169 = vadd.f32 0.0, %v1168
        %v1170 = vpop.f32.mrf.mxu0
        %1171 = vdwg.mxu0
        %v1172 = vpack.c.bf16 %v691, %v690
        %v1173 = vpack.c.bf16 %v693, %v692
        %v1174 = vpack.c.bf16 %v695, %v694
        %v1175 = vpack.c.bf16 %v697, %v696
        %v1176 = vpack.c.bf16 %v699, %v698
        %v1177 = vpack.c.bf16 %v701, %v700
        %v1178 = vpack.c.bf16 %v703, %v702
        %v1179 = vpack.c.bf16 %v705, %v704
        %v1180 = vpack.c.bf16 %v707, %v706
        %v1181 = vpack.c.bf16 %v709, %v708
        %v1182 = vpack.c.bf16 %v711, %v710
        %v1183 = vpack.c.bf16 %v713, %v712
        %v1184 = vpack.c.bf16 %v715, %v714
        %v1185 = vpack.c.bf16 %v717, %v716
        %v1186 = vpack.c.bf16 %v719, %v718
        %v1187 = vpack.c.bf16 %v721, %v720
        %v1204 = vunpack.c.l.b16 %v1172
        %v1205 = vunpack.c.h.b16 %v1172
        %v1206 = vunpack.c.l.b16 %v1173
        %v1207 = vunpack.c.h.b16 %v1173
        %v1208 = vunpack.c.l.b16 %v1174
        %v1209 = vunpack.c.h.b16 %v1174
        %v1210 = vunpack.c.l.b16 %v1175
        %v1211 = vunpack.c.h.b16 %v1175
        %v1212 = vunpack.c.l.b16 %v1176
        %v1213 = vunpack.c.h.b16 %v1176
        %v1214 = vunpack.c.l.b16 %v1177
        %v1215 = vunpack.c.h.b16 %v1177
        %v1216 = vunpack.c.l.b16 %v1178
        %v1217 = vunpack.c.h.b16 %v1178
        %v1218 = vunpack.c.l.b16 %v1179
        %v1219 = vunpack.c.h.b16 %v1179
        %v1220 = vunpack.c.l.b16 %v1180
        %v1221 = vunpack.c.h.b16 %v1180
        %v1222 = vunpack.c.l.b16 %v1181
        %v1223 = vunpack.c.h.b16 %v1181
        %v1224 = vunpack.c.l.b16 %v1182
        %v1225 = vunpack.c.h.b16 %v1182
        %v1226 = vunpack.c.l.b16 %v1183
        %v1227 = vunpack.c.h.b16 %v1183
        %v1228 = vunpack.c.l.b16 %v1184
        %v1229 = vunpack.c.h.b16 %v1184
        %v1230 = vunpack.c.l.b16 %v1185
        %v1231 = vunpack.c.h.b16 %v1185
        %v1232 = vunpack.c.l.b16 %v1186
        %v1233 = vunpack.c.h.b16 %v1186
        %v1234 = vunpack.c.l.b16 %v1187
        %v1235 = vunpack.c.h.b16 %v1187
        %v1236 = vpack.c.b16 %v1204, %v1204
        %v1237 = vpack.c.b16 %v1205, %v1205
        %v1238 = vpack.c.b16 %v1206, %v1206
        %v1239 = vpack.c.b16 %v1207, %v1207
        %v1240 = vpack.c.b16 %v1208, %v1208
        %v1241 = vpack.c.b16 %v1209, %v1209
        %v1242 = vpack.c.b16 %v1210, %v1210
        %v1243 = vpack.c.b16 %v1211, %v1211
        %v1244 = vpack.c.b16 %v1212, %v1212
        %v1245 = vpack.c.b16 %v1213, %v1213
        %v1246 = vpack.c.b16 %v1214, %v1214
        %v1247 = vpack.c.b16 %v1215, %v1215
        %v1248 = vpack.c.b16 %v1216, %v1216
        %v1249 = vpack.c.b16 %v1217, %v1217
        %v1250 = vpack.c.b16 %v1218, %v1218
        %v1251 = vpack.c.b16 %v1219, %v1219
        %v1252 = vpack.c.b16 %v1220, %v1220
        %v1253 = vpack.c.b16 %v1221, %v1221
        %v1254 = vpack.c.b16 %v1222, %v1222
        %v1255 = vpack.c.b16 %v1223, %v1223
        %v1256 = vpack.c.b16 %v1224, %v1224
        %v1257 = vpack.c.b16 %v1225, %v1225
        %v1258 = vpack.c.b16 %v1226, %v1226
        %v1259 = vpack.c.b16 %v1227, %v1227
        %v1260 = vpack.c.b16 %v1228, %v1228
        %v1261 = vpack.c.b16 %v1229, %v1229
        %v1262 = vpack.c.b16 %v1230, %v1230
        %v1263 = vpack.c.b16 %v1231, %v1231
        %v1264 = vpack.c.b16 %v1232, %v1232
        %v1265 = vpack.c.b16 %v1233, %v1233
        %v1266 = vpack.c.b16 %v1234, %v1234
        %v1267 = vpack.c.b16 %v1235, %v1235
        %1300 = vst [vmem:[%s317] sm:$0xf] %v1236
        %1301 = vst [vmem:[%s317 + $0x4] sm:$0xf] %v1237
        %1302 = vst [vmem:[%s317 + $0x8] sm:$0xf] %v1238
        %1303 = vst [vmem:[%s317 + $0xc] sm:$0xf] %v1239
        %1304 = vst [vmem:[%s317 + $0x10] sm:$0xf] %v1240
        %1305 = vst [vmem:[%s317 + $0x14] sm:$0xf] %v1241
        %1306 = vst [vmem:[%s317 + $0x18] sm:$0xf] %v1242
        %1307 = vst [vmem:[%s317 + $0x1c] sm:$0xf] %v1243
        %1308 = vst [vmem:[%s317 + $0x20] sm:$0xf] %v1244
        %1309 = vst [vmem:[%s317 + $0x24] sm:$0xf] %v1245
        %1310 = vst [vmem:[%s317 + $0x28] sm:$0xf] %v1246
        %1311 = vst [vmem:[%s317 + $0x2c] sm:$0xf] %v1247
        %1312 = vst [vmem:[%s317 + $0x30] sm:$0xf] %v1248
        %1313 = vst [vmem:[%s317 + $0x34] sm:$0xf] %v1249
        %1314 = vst [vmem:[%s317 + $0x38] sm:$0xf] %v1250
        %1315 = vst [vmem:[%s317 + $0x3c] sm:$0xf] %v1251
        %1316 = vst [vmem:[%s317 + $0x40] sm:$0xf] %v1252
        %1317 = vst [vmem:[%s317 + $0x44] sm:$0xf] %v1253
        %1318 = vst [vmem:[%s317 + $0x48] sm:$0xf] %v1254
        %1319 = vst [vmem:[%s317 + $0x4c] sm:$0xf] %v1255
        %1320 = vst [vmem:[%s317 + $0x50] sm:$0xf] %v1256
        %1321 = vst [vmem:[%s317 + $0x54] sm:$0xf] %v1257
        %1322 = vst [vmem:[%s317 + $0x58] sm:$0xf] %v1258
        %1323 = vst [vmem:[%s317 + $0x5c] sm:$0xf] %v1259
        %1324 = vst [vmem:[%s317 + $0x60] sm:$0xf] %v1260
        %1325 = vst [vmem:[%s317 + $0x64] sm:$0xf] %v1261
        %1326 = vst [vmem:[%s317 + $0x68] sm:$0xf] %v1262
        %1327 = vst [vmem:[%s317 + $0x6c] sm:$0xf] %v1263
        %1328 = vst [vmem:[%s317 + $0x70] sm:$0xf] %v1264
        %1329 = vst [vmem:[%s317 + $0x74] sm:$0xf] %v1265
        %1330 = vst [vmem:[%s317 + $0x78] sm:$0xf] %v1266
        %1331 = vst [vmem:[%s317 + $0x7c] sm:$0xf] %v1267
        %v1332 = vpack.c.bf16 %v824, %v821
        %v1333 = vpack.c.bf16 %v832, %v829
        %v1334 = vpack.c.bf16 %v840, %v837
        %v1335 = vpack.c.bf16 %v848, %v845
        %v1336 = vpack.c.bf16 %v856, %v853
        %v1337 = vpack.c.bf16 %v864, %v861
        %v1338 = vpack.c.bf16 %v872, %v869
        %v1339 = vpack.c.bf16 %v880, %v877
        %v1340 = vpack.c.bf16 %v888, %v885
        %v1341 = vpack.c.bf16 %v896, %v893
        %v1342 = vpack.c.bf16 %v904, %v901
        %v1343 = vpack.c.bf16 %v912, %v909
        %v1344 = vpack.c.bf16 %v920, %v917
        %v1345 = vpack.c.bf16 %v928, %v925
        %v1346 = vpack.c.bf16 %v936, %v933
        %v1347 = vpack.c.bf16 %v944, %v941
        %v1364 = vunpack.c.l.b16 %v1332
        %v1365 = vunpack.c.h.b16 %v1332
        %v1366 = vunpack.c.l.b16 %v1333
        %v1367 = vunpack.c.h.b16 %v1333
        %v1368 = vunpack.c.l.b16 %v1334
        %v1369 = vunpack.c.h.b16 %v1334
        %v1370 = vunpack.c.l.b16 %v1335
        %v1371 = vunpack.c.h.b16 %v1335
        %v1372 = vunpack.c.l.b16 %v1336
        %v1373 = vunpack.c.h.b16 %v1336
        %v1374 = vunpack.c.l.b16 %v1337
        %v1375 = vunpack.c.h.b16 %v1337
        %v1376 = vunpack.c.l.b16 %v1338
        %v1377 = vunpack.c.h.b16 %v1338
        %v1378 = vunpack.c.l.b16 %v1339
        %v1379 = vunpack.c.h.b16 %v1339
        %v1380 = vunpack.c.l.b16 %v1340
        %v1381 = vunpack.c.h.b16 %v1340
        %v1382 = vunpack.c.l.b16 %v1341
        %v1383 = vunpack.c.h.b16 %v1341
        %v1384 = vunpack.c.l.b16 %v1342
        %v1385 = vunpack.c.h.b16 %v1342
        %v1386 = vunpack.c.l.b16 %v1343
        %v1387 = vunpack.c.h.b16 %v1343
        %v1388 = vunpack.c.l.b16 %v1344
        %v1389 = vunpack.c.h.b16 %v1344
        %v1390 = vunpack.c.l.b16 %v1345
        %v1391 = vunpack.c.h.b16 %v1345
        %v1392 = vunpack.c.l.b16 %v1346
        %v1393 = vunpack.c.h.b16 %v1346
        %v1394 = vunpack.c.l.b16 %v1347
        %v1395 = vunpack.c.h.b16 %v1347
        %v1396 = vpack.c.b16 %v1364, %v1364
        %v1397 = vpack.c.b16 %v1365, %v1365
        %v1398 = vpack.c.b16 %v1366, %v1366
        %v1399 = vpack.c.b16 %v1367, %v1367
        %v1400 = vpack.c.b16 %v1368, %v1368
        %v1401 = vpack.c.b16 %v1369, %v1369
        %v1402 = vpack.c.b16 %v1370, %v1370
        %v1403 = vpack.c.b16 %v1371, %v1371
        %v1404 = vpack.c.b16 %v1372, %v1372
        %v1405 = vpack.c.b16 %v1373, %v1373
        %v1406 = vpack.c.b16 %v1374, %v1374
        %v1407 = vpack.c.b16 %v1375, %v1375
        %v1408 = vpack.c.b16 %v1376, %v1376
        %v1409 = vpack.c.b16 %v1377, %v1377
        %v1410 = vpack.c.b16 %v1378, %v1378
        %v1411 = vpack.c.b16 %v1379, %v1379
        %v1412 = vpack.c.b16 %v1380, %v1380
        %v1413 = vpack.c.b16 %v1381, %v1381
        %v1414 = vpack.c.b16 %v1382, %v1382
        %v1415 = vpack.c.b16 %v1383, %v1383
        %v1416 = vpack.c.b16 %v1384, %v1384
        %v1417 = vpack.c.b16 %v1385, %v1385
        %v1418 = vpack.c.b16 %v1386, %v1386
        %v1419 = vpack.c.b16 %v1387, %v1387
        %v1420 = vpack.c.b16 %v1388, %v1388
        %v1421 = vpack.c.b16 %v1389, %v1389
        %v1422 = vpack.c.b16 %v1390, %v1390
        %v1423 = vpack.c.b16 %v1391, %v1391
        %v1424 = vpack.c.b16 %v1392, %v1392
        %v1425 = vpack.c.b16 %v1393, %v1393
        %v1426 = vpack.c.b16 %v1394, %v1394
        %v1427 = vpack.c.b16 %v1395, %v1395
        %1460 = vst [vmem:[%s324] sm:$0xf] %v1396
        %1461 = vst [vmem:[%s324 + $0x4] sm:$0xf] %v1397
        %1462 = vst [vmem:[%s324 + $0x8] sm:$0xf] %v1398
        %1463 = vst [vmem:[%s324 + $0xc] sm:$0xf] %v1399
        %1464 = vst [vmem:[%s324 + $0x10] sm:$0xf] %v1400
        %1465 = vst [vmem:[%s324 + $0x14] sm:$0xf] %v1401
        %1466 = vst [vmem:[%s324 + $0x18] sm:$0xf] %v1402
        %1467 = vst [vmem:[%s324 + $0x1c] sm:$0xf] %v1403
        %1468 = vst [vmem:[%s324 + $0x20] sm:$0xf] %v1404
        %1469 = vst [vmem:[%s324 + $0x24] sm:$0xf] %v1405
        %1470 = vst [vmem:[%s324 + $0x28] sm:$0xf] %v1406
        %1471 = vst [vmem:[%s324 + $0x2c] sm:$0xf] %v1407
        %1472 = vst [vmem:[%s324 + $0x30] sm:$0xf] %v1408
        %1473 = vst [vmem:[%s324 + $0x34] sm:$0xf] %v1409
        %1474 = vst [vmem:[%s324 + $0x38] sm:$0xf] %v1410
        %1475 = vst [vmem:[%s324 + $0x3c] sm:$0xf] %v1411
        %1476 = vst [vmem:[%s324 + $0x40] sm:$0xf] %v1412
        %1477 = vst [vmem:[%s324 + $0x44] sm:$0xf] %v1413
        %1478 = vst [vmem:[%s324 + $0x48] sm:$0xf] %v1414
        %1479 = vst [vmem:[%s324 + $0x4c] sm:$0xf] %v1415
        %1480 = vst [vmem:[%s324 + $0x50] sm:$0xf] %v1416
        %1481 = vst [vmem:[%s324 + $0x54] sm:$0xf] %v1417
        %1482 = vst [vmem:[%s324 + $0x58] sm:$0xf] %v1418
        %1483 = vst [vmem:[%s324 + $0x5c] sm:$0xf] %v1419
        %1484 = vst [vmem:[%s324 + $0x60] sm:$0xf] %v1420
        %1485 = vst [vmem:[%s324 + $0x64] sm:$0xf] %v1421
        %1486 = vst [vmem:[%s324 + $0x68] sm:$0xf] %v1422
        %1487 = vst [vmem:[%s324 + $0x6c] sm:$0xf] %v1423
        %1488 = vst [vmem:[%s324 + $0x70] sm:$0xf] %v1424
        %1489 = vst [vmem:[%s324 + $0x74] sm:$0xf] %v1425
        %1490 = vst [vmem:[%s324 + $0x78] sm:$0xf] %v1426
        %1491 = vst [vmem:[%s324 + $0x7c] sm:$0xf] %v1427
        %v1492 = vpack.c.bf16 %v1049, %v1046
        %v1493 = vpack.c.bf16 %v1057, %v1054
        %v1494 = vpack.c.bf16 %v1065, %v1062
        %v1495 = vpack.c.bf16 %v1073, %v1070
        %v1496 = vpack.c.bf16 %v1081, %v1078
        %v1497 = vpack.c.bf16 %v1089, %v1086
        %v1498 = vpack.c.bf16 %v1097, %v1094
        %v1499 = vpack.c.bf16 %v1105, %v1102
        %v1500 = vpack.c.bf16 %v1113, %v1110
        %v1501 = vpack.c.bf16 %v1121, %v1118
        %v1502 = vpack.c.bf16 %v1129, %v1126
        %v1503 = vpack.c.bf16 %v1137, %v1134
        %v1504 = vpack.c.bf16 %v1145, %v1142
        %v1505 = vpack.c.bf16 %v1153, %v1150
        %v1506 = vpack.c.bf16 %v1161, %v1158
        %v1507 = vpack.c.bf16 %v1169, %v1166
        %v1524 = vunpack.c.l.b16 %v1492
        %v1525 = vunpack.c.h.b16 %v1492
        %v1526 = vunpack.c.l.b16 %v1493
        %v1527 = vunpack.c.h.b16 %v1493
        %v1528 = vunpack.c.l.b16 %v1494
        %v1529 = vunpack.c.h.b16 %v1494
        %v1530 = vunpack.c.l.b16 %v1495
        %v1531 = vunpack.c.h.b16 %v1495
        %v1532 = vunpack.c.l.b16 %v1496
        %v1533 = vunpack.c.h.b16 %v1496
        %v1534 = vunpack.c.l.b16 %v1497
        %v1535 = vunpack.c.h.b16 %v1497
        %v1536 = vunpack.c.l.b16 %v1498
        %v1537 = vunpack.c.h.b16 %v1498
        %v1538 = vunpack.c.l.b16 %v1499
        %v1539 = vunpack.c.h.b16 %v1499
        %v1540 = vunpack.c.l.b16 %v1500
        %v1541 = vunpack.c.h.b16 %v1500
        %v1542 = vunpack.c.l.b16 %v1501
        %v1543 = vunpack.c.h.b16 %v1501
        %v1544 = vunpack.c.l.b16 %v1502
        %v1545 = vunpack.c.h.b16 %v1502
        %v1546 = vunpack.c.l.b16 %v1503
        %v1547 = vunpack.c.h.b16 %v1503
        %v1548 = vunpack.c.l.b16 %v1504
        %v1549 = vunpack.c.h.b16 %v1504
        %v1550 = vunpack.c.l.b16 %v1505
        %v1551 = vunpack.c.h.b16 %v1505
        %v1552 = vunpack.c.l.b16 %v1506
        %v1553 = vunpack.c.h.b16 %v1506
        %v1554 = vunpack.c.l.b16 %v1507
        %v1555 = vunpack.c.h.b16 %v1507
        %v1556 = vpack.c.b16 %v1524, %v1524
        %v1557 = vpack.c.b16 %v1525, %v1525
        %v1558 = vpack.c.b16 %v1526, %v1526
        %v1559 = vpack.c.b16 %v1527, %v1527
        %v1560 = vpack.c.b16 %v1528, %v1528
        %v1561 = vpack.c.b16 %v1529, %v1529
        %v1562 = vpack.c.b16 %v1530, %v1530
        %v1563 = vpack.c.b16 %v1531, %v1531
        %v1564 = vpack.c.b16 %v1532, %v1532
        %v1565 = vpack.c.b16 %v1533, %v1533
        %v1566 = vpack.c.b16 %v1534, %v1534
        %v1567 = vpack.c.b16 %v1535, %v1535
        %v1568 = vpack.c.b16 %v1536, %v1536
        %v1569 = vpack.c.b16 %v1537, %v1537
        %v1570 = vpack.c.b16 %v1538, %v1538
        %v1571 = vpack.c.b16 %v1539, %v1539
        %v1572 = vpack.c.b16 %v1540, %v1540
        %v1573 = vpack.c.b16 %v1541, %v1541
        %v1574 = vpack.c.b16 %v1542, %v1542
        %v1575 = vpack.c.b16 %v1543, %v1543
        %v1576 = vpack.c.b16 %v1544, %v1544
        %v1577 = vpack.c.b16 %v1545, %v1545
        %v1578 = vpack.c.b16 %v1546, %v1546
        %v1579 = vpack.c.b16 %v1547, %v1547
        %v1580 = vpack.c.b16 %v1548, %v1548
        %v1581 = vpack.c.b16 %v1549, %v1549
        %v1582 = vpack.c.b16 %v1550, %v1550
        %v1583 = vpack.c.b16 %v1551, %v1551
        %v1584 = vpack.c.b16 %v1552, %v1552
        %v1585 = vpack.c.b16 %v1553, %v1553
        %v1586 = vpack.c.b16 %v1554, %v1554
        %v1587 = vpack.c.b16 %v1555, %v1555
        %1620 = vst [vmem:[%s331] sm:$0xf] %v1556
        %1621 = vst [vmem:[%s331 + $0x4] sm:$0xf] %v1557
        %1622 = vst [vmem:[%s331 + $0x8] sm:$0xf] %v1558
        %1623 = vst [vmem:[%s331 + $0xc] sm:$0xf] %v1559
        %1624 = vst [vmem:[%s331 + $0x10] sm:$0xf] %v1560
        %1625 = vst [vmem:[%s331 + $0x14] sm:$0xf] %v1561
        %1626 = vst [vmem:[%s331 + $0x18] sm:$0xf] %v1562
        %1627 = vst [vmem:[%s331 + $0x1c] sm:$0xf] %v1563
        %1628 = vst [vmem:[%s331 + $0x20] sm:$0xf] %v1564
        %1629 = vst [vmem:[%s331 + $0x24] sm:$0xf] %v1565
        %1630 = vst [vmem:[%s331 + $0x28] sm:$0xf] %v1566
        %1631 = vst [vmem:[%s331 + $0x2c] sm:$0xf] %v1567
        %1632 = vst [vmem:[%s331 + $0x30] sm:$0xf] %v1568
        %1633 = vst [vmem:[%s331 + $0x34] sm:$0xf] %v1569
        %1634 = vst [vmem:[%s331 + $0x38] sm:$0xf] %v1570
        %1635 = vst [vmem:[%s331 + $0x3c] sm:$0xf] %v1571
        %1636 = vst [vmem:[%s331 + $0x40] sm:$0xf] %v1572
        %1637 = vst [vmem:[%s331 + $0x44] sm:$0xf] %v1573
        %1638 = vst [vmem:[%s331 + $0x48] sm:$0xf] %v1574
        %1639 = vst [vmem:[%s331 + $0x4c] sm:$0xf] %v1575
        %1640 = vst [vmem:[%s331 + $0x50] sm:$0xf] %v1576
        %1641 = vst [vmem:[%s331 + $0x54] sm:$0xf] %v1577
        %1642 = vst [vmem:[%s331 + $0x58] sm:$0xf] %v1578
        %1643 = vst [vmem:[%s331 + $0x5c] sm:$0xf] %v1579
        %1644 = vst [vmem:[%s331 + $0x60] sm:$0xf] %v1580
        %1645 = vst [vmem:[%s331 + $0x64] sm:$0xf] %v1581
        %1646 = vst [vmem:[%s331 + $0x68] sm:$0xf] %v1582
        %1647 = vst [vmem:[%s331 + $0x6c] sm:$0xf] %v1583
        %1648 = vst [vmem:[%s331 + $0x70] sm:$0xf] %v1584
        %1649 = vst [vmem:[%s331 + $0x74] sm:$0xf] %v1585
        %1650 = vst [vmem:[%s331 + $0x78] sm:$0xf] %v1586
        %1651 = vst [vmem:[%s331 + $0x7c] sm:$0xf] %v1587
        %s1652 = sand.u32 %s126, 1
        %s1653 = scalar_lea.sflag [#allocation4], %s1652
        %s1654 = sand.u32 %s126, 1
        %s1655 = smul.addr %s1654, 128
        %s1656 = scalar_lea.vmem [#allocation10], %s1655
        %s1657 = sand.u32 %s29, 1
        %s1658 = scalar_lea.sflag [#allocation12], %s1657
        %s1659 = sand.u32 %s152, 1
        %s1660 = smul.addr %s1659, 128
        %s1661 = scalar_lea.vmem [#allocation11], %s1660
        %s1662 = sand.u32 %s29, 1
        %s1663 = scalar_lea.sflag [#allocation12], %s1662
        %s1664 = sand.u32 %s178, 1
        %s1665 = smul.addr %s1664, 128
        %s1666 = scalar_lea.vmem [#allocation13], %s1665
        // Predicated region
        $region53: #{tpu_custom_call.1} parent=35 // pred_check
          %p1667 = pneg %p136
        $region54: #{tpu_custom_call.1} parent=35 // pred_check_branch
          %1669 = sbr.rel (%p1667) target = $region56
        $region55: #{tpu_custom_call.1} parent=35 // pred_region
          %s1670 = smul.u32 32, %s29
          %s1672 = ssub.s32 2048, 2048
          %1673 = vsyncadd %s1653, %s1672
          %s1674 = smul.addr %s1670, 64
          %s1675 = scalar_lea.hbm %s4, %s1674
          %s1676 = sshll.u32 %s1656, 4
          %s1677 = int_to_ptr.vmem [resolvable:$true] %s1676
          %1682 = dma.vmem_to_hbm [thread:$0]  %s1677, 2048, %s1675, %s1653, 64, 64, 4
        $region56: #{tpu_custom_call.1} parent=35 // pred_fallthru
          _
        // Predicated region
        $region57: #{tpu_custom_call.1} parent=35 // pred_check
          %p1683 = pneg %p162
        $region58: #{tpu_custom_call.1} parent=35 // pred_check_branch
          %1685 = sbr.rel (%p1683) target = $region60
        $region59: #{tpu_custom_call.1} parent=35 // pred_region
          %s1686 = smul.u32 32, %s29
          %s1688 = ssub.s32 2048, 2048
          %1689 = vsyncadd %s1658, %s1688
          %s1690 = smul.addr %s1686, 64
          %s1691 = scalar_lea.hbm %s5, %s1690
          %s1692 = sshll.u32 %s1661, 4
          %s1693 = int_to_ptr.vmem [resolvable:$true] %s1692
          %1698 = dma.vmem_to_hbm [thread:$0]  %s1693, 2048, %s1691, %s1658, 64, 64, 4
        $region60: #{tpu_custom_call.1} parent=35 // pred_fallthru
          _
        // Predicated region
        $region61: #{tpu_custom_call.1} parent=35 // pred_check
          %p1699 = pneg %p188
        $region62: #{tpu_custom_call.1} parent=35 // pred_check_branch
          %1701 = sbr.rel (%p1699) target = $region64
        $region63: #{tpu_custom_call.1} parent=35 // pred_region
          %s1702 = smul.u32 32, %s29
          %s1704 = ssub.s32 2048, 2048
          %1705 = vsyncadd %s1663, %s1704
          %s1706 = smul.addr %s1702, 64
          %s1707 = scalar_lea.hbm %s6, %s1706
          %s1708 = sshll.u32 %s1666, 4
          %s1709 = int_to_ptr.vmem [resolvable:$true] %s1708
          %1714 = dma.vmem_to_hbm [thread:$0]  %s1709, 2048, %s1707, %s1663, 64, 64, 4
        $region64: #{tpu_custom_call.1} parent=35 // pred_fallthru
          _
      $region36: #{tpu_custom_call.1} parent=5 // pred_fallthru
        _
      %p1715 = scmp.le.s32.totalorder 2, %s24
      // Predicated region
      $region65: #{tpu_custom_call.1} parent=5 // pred_check
        %p1716 = pneg %p1715
      $region66: #{tpu_custom_call.1} parent=5 // pred_check_branch
        %1718 = sbr.rel (%p1716) target = $region68
      $region67: #{tpu_custom_call.1} parent=5 // pred_region
        %s1719 = ssub.s32 %s24, 2
        // Predicated region
        $region69: #{tpu_custom_call.1} parent=67 // pred_check
          %p1720 = pneg %p142
        $region70: #{tpu_custom_call.1} parent=67 // pred_check_branch
          %1722 = sbr.rel (%p1720) target = $region72
        $region71: #{tpu_custom_call.1} parent=67 // pred_region
          %s1723 = sand.u32 %s127, 1
          %s1724 = scalar_lea.sflag [#allocation4], %s1723
          %s1725 = sand.u32 %s127, 1
          %s1726 = smul.addr %s1725, 128
          %s1727 = scalar_lea.vmem [#allocation10], %s1726
          %1728 = dma.done %s1724, 2048
        $region72: #{tpu_custom_call.1} parent=67 // pred_fallthru
          _
        // Predicated region
        $region73: #{tpu_custom_call.1} parent=67 // pred_check
          %p1729 = pneg %p168
        $region74: #{tpu_custom_call.1} parent=67 // pred_check_branch
          %1731 = sbr.rel (%p1729) target = $region76
        $region75: #{tpu_custom_call.1} parent=67 // pred_region
          %s1732 = sand.u32 %s30, 1
          %s1733 = scalar_lea.sflag [#allocation12], %s1732
          %s1734 = sand.u32 %s153, 1
          %s1735 = smul.addr %s1734, 128
          %s1736 = scalar_lea.vmem [#allocation11], %s1735
          %1737 = dma.done %s1733, 2048
        $region76: #{tpu_custom_call.1} parent=67 // pred_fallthru
          _
        // Predicated region
        $region77: #{tpu_custom_call.1} parent=67 // pred_check
          %p1738 = pneg %p194
        $region78: #{tpu_custom_call.1} parent=67 // pred_check_branch
          %1740 = sbr.rel (%p1738) target = $region80
        $region79: #{tpu_custom_call.1} parent=67 // pred_region
          %s1741 = sand.u32 %s30, 1
          %s1742 = scalar_lea.sflag [#allocation12], %s1741
          %s1743 = sand.u32 %s179, 1
          %s1744 = smul.addr %s1743, 128
          %s1745 = scalar_lea.vmem [#allocation13], %s1744
          %1746 = dma.done %s1742, 2048
        $region80: #{tpu_custom_call.1} parent=67 // pred_fallthru
          _
      $region68: #{tpu_custom_call.1} parent=5 // pred_fallthru
        _
    $region6: #{tpu_custom_call.1} parent=1 // loop_footer
      %s28 = sadd.s32 1, %s24
    $region7: #{tpu_custom_call.1} parent=1 // loop_footer_branch
      %23 = sbr.rel target = $region3
    $region8: #{tpu_custom_call.1} parent=1 // loop_exit
      _
    %1747 = vsyncpa [#allocation3], 1
    %s1748 = scalar_lea.sflag [#allocation3], 1
    %1749 = vsyncpa %s1748, 1
    %1750 = vsyncpa [#allocation6], 1
    %1751 = vsyncpa [#allocation9], 1
    %1752 = vsyncpa [#allocation4], 1
    %s1753 = scalar_lea.sflag [#allocation4], 1
    %1754 = vsyncpa %s1753, 1
    %1755 = vsyncpa [#allocation12], 1
    %s1756 = scalar_lea.sflag [#allocation12], 1
    %1757 = vsyncpa %s1756, 1

</llo_original>
